<compile_context>
chip_gen: v7x
topology: tpu7x:2x2x1
jax: 0.10.0
libtpu: 0.0.40
codegen_flags: <defaults>
</compile_context>

<pallas_src>
import functools

import jax
import jax.numpy as jnp
from jax.experimental import pallas as pl
from jax.experimental.pallas import tpu as pltpu


# ------------------------------ fused kernel --------------------------------

def _fused_block_kernel(*args, stride, has_expand, use_res):
    if has_expand:
        (x_ref, we_ref, be_ref,
         wdw_ref, bdw_ref, wp_ref, bp_ref,
         o_ref, hpad_ref) = args
    else:
        (x_ref, wdw_ref, bdw_ref, wp_ref, bp_ref, o_ref, hpad_ref) = args
        we_ref = be_ref = None

    H, W, cin = x_ref.shape            # full image (batch dim squeezed away)
    rt, wo, cout = o_ref.shape         # output row band
    hidden = wdw_ref.shape[-1]
    core = hpad_ref.shape[0] - 2       # input/hidden rows covered by this band

    r = pl.program_id(1)
    n_bands = pl.num_programs(1)
    in_start = r * core                # first non-halo input row of the band

    def expand_rows(x2d):
        """1x1 expansion conv (BN scale pre-folded into weights) + bias + ReLU6."""
        if has_expand:
            h = jnp.dot(x2d, we_ref[...], preferred_element_type=jnp.float32)
            return jnp.clip(h + be_ref[...], 0.0, 6.0)
        return x2d.astype(jnp.float32)          # expand_ratio == 1: identity

    # ---- 1) 1x1 expansion of the band's core rows ---------------------------
    x_core = x_ref[pl.ds(in_start, core), :, :]               # (core, W, cin)
    x2d_core = x_core.reshape(core * W, cin)
    h_core = expand_rows(x2d_core).reshape(core, W, hidden)

    # ---- 2) padded hidden band in VMEM: halo-only zeroing -------------------
    # Scratch is per-core and persists across grid steps; the halo is rewritten
    # every step, so this stays safe under "parallel" batch semantics.
    zcol = jnp.zeros((core + 2, hidden), jnp.float32)
    hpad_ref[:, 0, :] = zcol
    hpad_ref[:, W + 1, :] = zcol
    hpad_ref[1:core + 1, 1:W + 1, :] = h_core

    zrow = jnp.zeros((W, hidden), jnp.float32)

    @pl.when(r == 0)                                  # top halo = conv padding
    def _top_zero():
        hpad_ref[0, 1:W + 1, :] = zrow

    @pl.when(r > 0)                                   # top halo = row above band
    def _top_fill():
        xa = x_ref[pl.ds(in_start - 1, 1), :, :].reshape(W, cin)
        hpad_ref[0, 1:W + 1, :] = expand_rows(xa)

    @pl.when(r == n_bands - 1)                        # bottom halo = padding
    def _bot_zero():
        hpad_ref[core + 1, 1:W + 1, :] = zrow

    @pl.when(r < n_bands - 1)                         # bottom halo = row below
    def _bot_fill():
        xb = x_ref[pl.ds(in_start + core, 1), :, :].reshape(W, cin)
        hpad_ref[core + 1, 1:W + 1, :] = expand_rows(xb)

    # ---- 3) 3x3 depthwise conv (BN scale folded into w_dw) + bias + ReLU6 ---
    # Taps are loaded from the padded scratch ref and accumulated in registers;
    # nothing goes back to VMEM until the projection result is stored.
    row_span = stride * (rt - 1) + 1
    col_span = stride * (wo - 1) + 1
    acc = None
    for kh in range(3):
        for kw in range(3):
            tap = hpad_ref[kh:kh + row_span, kw:kw + col_span, :]
            if stride != 1:
                # TODO(synk): a one-time even/odd deinterleave of hpad would
                # turn these strided gathers into contiguous slices (stride=2).
                tap = tap[::stride, ::stride, :]
            contrib = tap * wdw_ref[kh, kw, :]
            acc = contrib if acc is None else acc + contrib
    y = jnp.clip(acc + bdw_ref[0, :], 0.0, 6.0)               # (rt, wo, hidden)

    # ---- 4) 1x1 projection conv (BN scale folded) + bias, residual ----------
    y2d = y.reshape(rt * wo, hidden)
    o2d = jnp.dot(y2d, wp_ref[...], preferred_element_type=jnp.float32)
    o2d = o2d + bp_ref[...]
    if use_res:
        # use_res implies stride == 1, so core == rt, wo == W, cout == cin.
        o2d = o2d + x2d_core
    o_ref[...] = o2d.reshape(rt, wo, cout)


# --------------------------- parameter preparation ---------------------------

def _prep_params(params, has_expand):
    """Fold folded-BN scales into the conv weights; keep only biases separate."""
    p = {}
    if has_expand:
        p["w_expand"] = params["w_expand"] * params["s_expand"][None, :]
        p["b_expand"] = params["b_expand"].reshape(1, -1)
    p["w_dw"] = params["w_dw"] * params["s_dw"][None, None, :]
    p["b_dw"] = params["b_dw"].reshape(1, -1)
    p["w_proj"] = params["w_proj"] * params["s_proj"][None, :]
    p["b_proj"] = params["b_proj"].reshape(1, -1)
    return p


# ------------------------------ host wrapper ---------------------------------

def inverted_residual_forward(x_nchw, params, *, stride, row_tile=8):
    """Forward of InvertedResidual.  Input/output are NCHW (PyTorch layout)."""
    n, cin, h, w = x_nchw.shape
    # Boundary layout conversion (once per model when blocks are chained).
    x = jnp.transpose(x_nchw, (0, 2, 3, 1)).astype(jnp.float32)   # NHWC

    has_expand = "w_expand" in params
    hidden = params["w_dw"].shape[-1]
    cout = params["w_proj"].shape[1]
    ho = (h - 1) // stride + 1
    wo = (w - 1) // stride + 1
    use_res = (stride == 1 and cin == cout)

    # Row-band tiling (spatial grid axis).  stride=2 currently uses one band.
    if stride == 1 and ho % row_tile == 0:
        rt = row_tile
    else:
        rt = ho          # TODO(synk): generalize row banding to stride=2.
    n_bands = ho // rt
    core = rt if stride == 1 else h          # input rows produced per band

    fp = _prep_params(params, has_expand)

    # Input image: batch-squeezed block, constant along the band axis => stays
    # resident in VMEM across all bands of one image.  Weights/biases use
    # constant block indices => resident across the whole grid.
    in_specs = [pl.BlockSpec((None, h, w, cin), lambda b, r: (b, 0, 0, 0))]
    inputs = [x]
    if has_expand:
        in_specs += [pl.BlockSpec((cin, hidden), lambda b, r: (0, 0)),
                     pl.BlockSpec((1, hidden), lambda b, r: (0, 0))]
        inputs += [fp["w_expand"], fp["b_expand"]]
    in_specs += [pl.BlockSpec((3, 3, hidden), lambda b, r: (0, 0, 0)),
                 pl.BlockSpec((1, hidden), lambda b, r: (0, 0)),
                 pl.BlockSpec((hidden, cout), lambda b, r: (0, 0)),
                 pl.BlockSpec((1, cout), lambda b, r: (0, 0))]
    inputs += [fp["w_dw"], fp["b_dw"], fp["w_proj"], fp["b_proj"]]

    out_spec = pl.BlockSpec((None, rt, wo, cout), lambda b, r: (b, r, 0, 0))

    flops_per_img = ((2 * h * w * cin * hidden if has_expand else 0)
                     + 2 * 9 * ho * wo * hidden
                     + 2 * ho * wo * hidden * cout)
    bytes_accessed = (int(x.size) * 4
                      + sum(int(v.size) * 4 for v in inputs[1:])
                      + n * ho * wo * cout * 4)
    cost = pl.CostEstimate(flops=int(n * flops_per_img), transcendentals=0,
                           bytes_accessed=int(bytes_accessed))

    kernel = functools.partial(_fused_block_kernel, stride=stride,
                               has_expand=has_expand, use_res=use_res)

    out = pl.pallas_call(
        kernel,
        out_shape=jax.ShapeDtypeStruct((n, ho, wo, cout), jnp.float32),
        grid=(n, n_bands),
        in_specs=in_specs,
        out_specs=out_spec,
        scratch_shapes=[
            pltpu.VMEM((core + 2, w + 2, hidden), jnp.float32),  # padded band
        ],
        compiler_params=pltpu.CompilerParams(
            dimension_semantics=("parallel", "arbitrary"),
            vmem_limit_bytes=48 * 1024 * 1024),   # fits v7x's 64 MiB per TC
        cost_estimate=cost,
    )(*inputs)

    return jnp.transpose(out, (0, 3, 1, 2))   # back to NCHW


# -------------------------- deterministic parameters -------------------------

def _fold_bn(gamma, beta, mean, var, eps=1e-5):
    scale = gamma / jnp.sqrt(var + eps)
    bias = beta - mean * scale
    return scale, bias


def make_params(key, inp, oup, expand_ratio):
    hidden = int(round(inp * expand_ratio))
    keys = jax.random.split(key, 15)
    params = {}

    def bn_params(k0, k1, k2, k3, c):
        gamma = 0.5 + jax.random.uniform(k0, (c,), jnp.float32)
        beta = 0.1 * jax.random.normal(k1, (c,), jnp.float32)
        mean = 0.1 * jax.random.normal(k2, (c,), jnp.float32)
        var = 0.5 + jax.random.uniform(k3, (c,), jnp.float32)
        return _fold_bn(gamma, beta, mean, var)

    if expand_ratio != 1:
        # PyTorch weight (hidden, inp, 1, 1) -> (inp, hidden)
        params["w_expand"] = 0.1 * jax.random.normal(
            keys[0], (inp, hidden), jnp.float32)
        params["s_expand"], params["b_expand"] = bn_params(
            keys[1], keys[2], keys[3], keys[4], hidden)

    # PyTorch depthwise weight (hidden, 1, 3, 3) -> (3, 3, hidden)
    params["w_dw"] = 0.1 * jax.random.normal(
        keys[5], (3, 3, hidden), jnp.float32)
    params["s_dw"], params["b_dw"] = bn_params(
        keys[6], keys[7], keys[8], keys[9], hidden)

    # PyTorch projection weight (oup, hidden, 1, 1) -> (hidden, oup)
    params["w_proj"] = 0.1 * jax.random.normal(
        keys[10], (hidden, oup), jnp.float32)
    params["s_proj"], params["b_proj"] = bn_params(
        keys[11], keys[12], keys[13], keys[14], oup)
    return params


# ------------------------------ pure-JAX reference ---------------------------

def reference_forward(x_nchw, params, *, stride):
    x = jnp.transpose(x_nchw, (0, 2, 3, 1)).astype(jnp.float32)
    h = x
    if "w_expand" in params:
        h = jnp.einsum("nhwc,cd->nhwd", h, params["w_expand"])
        h = jnp.clip(h * params["s_expand"] + params["b_expand"], 0.0, 6.0)
    H, W = x.shape[1], x.shape[2]
    ho = (H - 1) // stride + 1
    wo = (W - 1) // stride + 1
    hp = jnp.pad(h, ((0, 0), (1, 1), (1, 1), (0, 0)))
    acc = jnp.zeros((x.shape[0], ho, wo, h.shape[-1]), jnp.float32)
    for kh in range(3):
        for kw in range(3):
            tap = hp[:,
                     kh:kh + stride * (ho - 1) + 1:stride,
                     kw:kw + stride * (wo - 1) + 1:stride, :]
            acc = acc + tap * params["w_dw"][kh, kw, :]
    h = jnp.clip(acc * params["s_dw"] + params["b_dw"], 0.0, 6.0)
    o = jnp.einsum("nhwc,cd->nhwd", h, params["w_proj"])
    o = o * params["s_proj"] + params["b_proj"]
    if stride == 1 and x.shape[-1] == o.shape[-1]:
        o = o + x
    return jnp.transpose(o, (0, 3, 1, 2))


# ----------------------------------- main ------------------------------------

if __name__ == "__main__":
    key = jax.random.PRNGKey(0)
    # (inp, oup, stride, expand_ratio, N, H, W, row_tile)
    configs = [
        (8, 8, 1, 2, 2, 16, 16, 4),    # expansion + residual, 4 row bands
        (16, 16, 1, 1, 2, 16, 16, 8),  # expand_ratio=1 (no expansion) + residual
        (8, 16, 1, 3, 1, 8, 16, 8),    # expansion, no residual, single band
    ]
    for idx, (inp, oup, stride, er, n, hgt, wid, rtile) in enumerate(configs):
        key, kx, kp = jax.random.split(key, 3)
        x = jax.random.normal(kx, (n, inp, hgt, wid), jnp.float32)   # NCHW
        params = make_params(kp, inp, oup, er)

        out = jax.block_until_ready(
            inverted_residual_forward(x, params, stride=stride, row_tile=rtile))
        ref = jax.block_until_ready(reference_forward(x, params, stride=stride))

        ho = (hgt - 1) // stride + 1
        wo = (wid - 1) // stride + 1
        assert out.shape == (n, oup, ho, wo), (idx, out.shape)
        err = float(jnp.max(jnp.abs(out - ref)))
        assert jnp.allclose(out, ref, rtol=1e-4, atol=1e-4), (idx, err)

    print("KERNEL_OK")
</pallas_src>

<mosaic_0001>
module attributes {stable_mosaic.version = 11 : i64} {
  func.func @_fused_block_kernel(%arg0: i32, %arg1: i32, %arg2: memref<1x16x16x8xf32, #tpu.memory_space<vmem>>, %arg3: memref<8x16xf32, #tpu.memory_space<vmem>>, %arg4: memref<1x16xf32, #tpu.memory_space<vmem>>, %arg5: memref<3x3x16xf32, #tpu.memory_space<vmem>>, %arg6: memref<1x16xf32, #tpu.memory_space<vmem>>, %arg7: memref<16x8xf32, #tpu.memory_space<vmem>>, %arg8: memref<1x8xf32, #tpu.memory_space<vmem>>, %arg9: memref<1x4x16x8xf32, #tpu.memory_space<vmem>>, %arg10: memref<6x18x16xf32, #tpu.memory_space<vmem>>) attributes {dimension_semantics = [#tpu.dimension_semantics<parallel>, #tpu.dimension_semantics<arbitrary>], iteration_bounds = array<i64: 2, 4>, scalar_prefetch = 0 : i64, scratch_operands = 1 : i64, tpu.core_type = #tpu.core_type<tc>, window_params = [{transform_indices = @transform_0, window_bounds = array<i64: 1, 16, 16, 8>}, {pipeline_mode = #tpu.pipeline_mode<synchronous>, transform_indices = @transform_1, window_bounds = array<i64: 8, 16>}, {pipeline_mode = #tpu.pipeline_mode<synchronous>, transform_indices = @transform_2, window_bounds = array<i64: 1, 16>}, {pipeline_mode = #tpu.pipeline_mode<synchronous>, transform_indices = @transform_3, window_bounds = array<i64: 3, 3, 16>}, {pipeline_mode = #tpu.pipeline_mode<synchronous>, transform_indices = @transform_4, window_bounds = array<i64: 1, 16>}, {pipeline_mode = #tpu.pipeline_mode<synchronous>, transform_indices = @transform_5, window_bounds = array<i64: 16, 8>}, {pipeline_mode = #tpu.pipeline_mode<synchronous>, transform_indices = @transform_6, window_bounds = array<i64: 1, 8>}, {transform_indices = @transform_7, window_bounds = array<i64: 1, 4, 16, 8>}]} {
    %c4_i32 = arith.constant 4 : i32
    %0 = arith.muli %arg1, %c4_i32 : i32
    %c0 = arith.constant 0 : index
    %1 = arith.index_cast %0 : i32 to index
    %c0_0 = arith.constant 0 : index
    %c0_1 = arith.constant 0 : index
    %2 = vector.load %arg2[%c0, %1, %c0_0, %c0_1] : memref<1x16x16x8xf32, #tpu.memory_space<vmem>>, vector<1x4x16x8xf32>
    %3 = vector.shape_cast %2 : vector<1x4x16x8xf32> to vector<4x16x8xf32>
    %4 = vector.shape_cast %3 : vector<4x16x8xf32> to vector<64x8xf32>
    %c0_2 = arith.constant 0 : index
    %c0_3 = arith.constant 0 : index
    %5 = vector.load %arg3[%c0_2, %c0_3] : memref<8x16xf32, #tpu.memory_space<vmem>>, vector<8x16xf32>
    %cst = arith.constant dense<0.000000e+00> : vector<64x16xf32>
    %6 = tpu.matmul %4, %5, %cst {dimension_numbers = #tpu.dot_dimension_numbers<[1], [0], [0], [1], [0, 0, 1, 1], [], []>} : vector<64x8xf32>, vector<8x16xf32>, vector<64x16xf32> -> vector<64x16xf32>
    %c0_4 = arith.constant 0 : index
    %c0_5 = arith.constant 0 : index
    %7 = vector.load %arg4[%c0_4, %c0_5] : memref<1x16xf32, #tpu.memory_space<vmem>>, vector<1x16xf32>
    %8 = vector.broadcast %7 : vector<1x16xf32> to vector<64x16xf32>
    %9 = arith.addf %6, %8 : vector<64x16xf32>
    %cst_6 = arith.constant 0.000000e+00 : f32
    %cst_7 = arith.constant 6.000000e+00 : f32
    %10 = vector.broadcast %cst_6 : f32 to vector<64x16xf32>
    %11 = arith.maximumf %10, %9 : vector<64x16xf32>
    %12 = vector.broadcast %cst_7 : f32 to vector<64x16xf32>
    %13 = arith.minimumf %12, %11 : vector<64x16xf32>
    %14 = vector.shape_cast %13 : vector<64x16xf32> to vector<4x16x16xf32>
    %cst_8 = arith.constant 0.000000e+00 : f32
    %15 = vector.broadcast %cst_8 : f32 to vector<6x16xf32>
    %c0_9 = arith.constant 0 : index
    %c0_10 = arith.constant 0 : index
    %c0_11 = arith.constant 0 : index
    %16 = vector.load %arg10[%c0_9, %c0_10, %c0_11] : memref<6x18x16xf32, #tpu.memory_space<vmem>>, vector<6x1x16xf32>
    %17 = vector.shape_cast %16 : vector<6x1x16xf32> to vector<6x16xf32>
    %18 = vector.shape_cast %15 : vector<6x16xf32> to vector<6x1x16xf32>
    tpu.vector_store %arg10[%c0_9, %c0_10, %c0_11], %18 {strides = array<i32>} : memref<6x18x16xf32, #tpu.memory_space<vmem>>, vector<6x1x16xf32>,
    %c0_12 = arith.constant 0 : index
    %c17 = arith.constant 17 : index
    %c0_13 = arith.constant 0 : index
    %19 = vector.load %arg10[%c0_12, %c17, %c0_13] : memref<6x18x16xf32, #tpu.memory_space<vmem>>, vector<6x1x16xf32>
    %20 = vector.shape_cast %19 : vector<6x1x16xf32> to vector<6x16xf32>
    %21 = vector.shape_cast %15 : vector<6x16xf32> to vector<6x1x16xf32>
    tpu.vector_store %arg10[%c0_12, %c17, %c0_13], %21 {strides = array<i32>} : memref<6x18x16xf32, #tpu.memory_space<vmem>>, vector<6x1x16xf32>,
    %c1 = arith.constant 1 : index
    %c1_14 = arith.constant 1 : index
    %c0_15 = arith.constant 0 : index
    %22 = vector.load %arg10[%c1, %c1_14, %c0_15] : memref<6x18x16xf32, #tpu.memory_space<vmem>>, vector<4x16x16xf32>
    tpu.vector_store %arg10[%c1, %c1_14, %c0_15], %14 {strides = array<i32>} : memref<6x18x16xf32, #tpu.memory_space<vmem>>, vector<4x16x16xf32>,
    %cst_16 = arith.constant 0.000000e+00 : f32
    %23 = vector.broadcast %cst_16 : f32 to vector<16x16xf32>
    %c0_i32 = arith.constant 0 : i32
    %24 = arith.cmpi eq, %arg1, %c0_i32 : i32
    %25 = arith.extui %24 : i1 to i32
    %c0_i32_17 = arith.constant 0 : i32
    %26 = arith.cmpi ne, %25, %c0_i32_17 : i32
    scf.if %26 {
      %c0_89 = arith.constant 0 : index
      %c1_90 = arith.constant 1 : index
      %c0_91 = arith.constant 0 : index
      %118 = vector.load %arg10[%c0_89, %c1_90, %c0_91] : memref<6x18x16xf32, #tpu.memory_space<vmem>>, vector<1x16x16xf32>
      %119 = vector.shape_cast %118 : vector<1x16x16xf32> to vector<16x16xf32>
      %120 = vector.shape_cast %23 : vector<16x16xf32> to vector<1x16x16xf32>
      tpu.vector_store %arg10[%c0_89, %c1_90, %c0_91], %120 {strides = array<i32>} : memref<6x18x16xf32, #tpu.memory_space<vmem>>, vector<1x16x16xf32>,
    } else {
    }
    %c0_i32_18 = arith.constant 0 : i32
    %27 = arith.cmpi sgt, %arg1, %c0_i32_18 : i32
    %28 = arith.extui %27 : i1 to i32
    %c0_i32_19 = arith.constant 0 : i32
    %29 = arith.cmpi ne, %28, %c0_i32_19 : i32
    scf.if %29 {
      %c1_i32 = arith.constant 1 : i32
      %118 = arith.subi %0, %c1_i32 : i32
      %c0_89 = arith.constant 0 : index
      %119 = arith.index_cast %118 : i32 to index
      %c0_90 = arith.constant 0 : index
      %c0_91 = arith.constant 0 : index
      %120 = vector.load %arg2[%c0_89, %119, %c0_90, %c0_91] : memref<1x16x16x8xf32, #tpu.memory_space<vmem>>, vector<1x1x16x8xf32>
      %121 = vector.shape_cast %120 : vector<1x1x16x8xf32> to vector<1x16x8xf32>
      %122 = vector.shape_cast %121 : vector<1x16x8xf32> to vector<16x8xf32>
      %c0_92 = arith.constant 0 : index
      %c0_93 = arith.constant 0 : index
      %123 = vector.load %arg3[%c0_92, %c0_93] : memref<8x16xf32, #tpu.memory_space<vmem>>, vector<8x16xf32>
      %cst_94 = arith.constant dense<0.000000e+00> : vector<16x16xf32>
      %124 = tpu.matmul %122, %123, %cst_94 {dimension_numbers = #tpu.dot_dimension_numbers<[1], [0], [0], [1], [0, 0, 1, 1], [], []>} : vector<16x8xf32>, vector<8x16xf32>, vector<16x16xf32> -> vector<16x16xf32>
      %c0_95 = arith.constant 0 : index
      %c0_96 = arith.constant 0 : index
      %125 = vector.load %arg4[%c0_95, %c0_96] : memref<1x16xf32, #tpu.memory_space<vmem>>, vector<1x16xf32>
      %126 = vector.broadcast %125 : vector<1x16xf32> to vector<16x16xf32>
      %127 = arith.addf %124, %126 : vector<16x16xf32>
      %cst_97 = arith.constant 0.000000e+00 : f32
      %cst_98 = arith.constant 6.000000e+00 : f32
      %128 = vector.broadcast %cst_97 : f32 to vector<16x16xf32>
      %129 = arith.maximumf %128, %127 : vector<16x16xf32>
      %130 = vector.broadcast %cst_98 : f32 to vector<16x16xf32>
      %131 = arith.minimumf %130, %129 : vector<16x16xf32>
      %c0_99 = arith.constant 0 : index
      %c1_100 = arith.constant 1 : index
      %c0_101 = arith.constant 0 : index
      %132 = vector.load %arg10[%c0_99, %c1_100, %c0_101] : memref<6x18x16xf32, #tpu.memory_space<vmem>>, vector<1x16x16xf32>
      %133 = vector.shape_cast %132 : vector<1x16x16xf32> to vector<16x16xf32>
      %134 = vector.shape_cast %131 : vector<16x16xf32> to vector<1x16x16xf32>
      tpu.vector_store %arg10[%c0_99, %c1_100, %c0_101], %134 {strides = array<i32>} : memref<6x18x16xf32, #tpu.memory_space<vmem>>, vector<1x16x16xf32>,
    } else {
    }
    %c3_i32 = arith.constant 3 : i32
    %30 = arith.cmpi eq, %arg1, %c3_i32 : i32
    %31 = arith.extui %30 : i1 to i32
    %c0_i32_20 = arith.constant 0 : i32
    %32 = arith.cmpi ne, %31, %c0_i32_20 : i32
    scf.if %32 {
      %c5 = arith.constant 5 : index
      %c1_89 = arith.constant 1 : index
      %c0_90 = arith.constant 0 : index
      %118 = vector.load %arg10[%c5, %c1_89, %c0_90] : memref<6x18x16xf32, #tpu.memory_space<vmem>>, vector<1x16x16xf32>
      %119 = vector.shape_cast %118 : vector<1x16x16xf32> to vector<16x16xf32>
      %120 = vector.shape_cast %23 : vector<16x16xf32> to vector<1x16x16xf32>
      tpu.vector_store %arg10[%c5, %c1_89, %c0_90], %120 {strides = array<i32>} : memref<6x18x16xf32, #tpu.memory_space<vmem>>, vector<1x16x16xf32>,
    } else {
    }
    %c3_i32_21 = arith.constant 3 : i32
    %33 = arith.cmpi slt, %arg1, %c3_i32_21 : i32
    %34 = arith.extui %33 : i1 to i32
    %c0_i32_22 = arith.constant 0 : i32
    %35 = arith.cmpi ne, %34, %c0_i32_22 : i32
    scf.if %35 {
      %c4_i32_89 = arith.constant 4 : i32
      %118 = arith.addi %0, %c4_i32_89 : i32
      %c0_90 = arith.constant 0 : index
      %119 = arith.index_cast %118 : i32 to index
      %c0_91 = arith.constant 0 : index
      %c0_92 = arith.constant 0 : index
      %120 = vector.load %arg2[%c0_90, %119, %c0_91, %c0_92] : memref<1x16x16x8xf32, #tpu.memory_space<vmem>>, vector<1x1x16x8xf32>
      %121 = vector.shape_cast %120 : vector<1x1x16x8xf32> to vector<1x16x8xf32>
      %122 = vector.shape_cast %121 : vector<1x16x8xf32> to vector<16x8xf32>
      %c0_93 = arith.constant 0 : index
      %c0_94 = arith.constant 0 : index
      %123 = vector.load %arg3[%c0_93, %c0_94] : memref<8x16xf32, #tpu.memory_space<vmem>>, vector<8x16xf32>
      %cst_95 = arith.constant dense<0.000000e+00> : vector<16x16xf32>
      %124 = tpu.matmul %122, %123, %cst_95 {dimension_numbers = #tpu.dot_dimension_numbers<[1], [0], [0], [1], [0, 0, 1, 1], [], []>} : vector<16x8xf32>, vector<8x16xf32>, vector<16x16xf32> -> vector<16x16xf32>
      %c0_96 = arith.constant 0 : index
      %c0_97 = arith.constant 0 : index
      %125 = vector.load %arg4[%c0_96, %c0_97] : memref<1x16xf32, #tpu.memory_space<vmem>>, vector<1x16xf32>
      %126 = vector.broadcast %125 : vector<1x16xf32> to vector<16x16xf32>
      %127 = arith.addf %124, %126 : vector<16x16xf32>
      %cst_98 = arith.constant 0.000000e+00 : f32
      %cst_99 = arith.constant 6.000000e+00 : f32
      %128 = vector.broadcast %cst_98 : f32 to vector<16x16xf32>
      %129 = arith.maximumf %128, %127 : vector<16x16xf32>
      %130 = vector.broadcast %cst_99 : f32 to vector<16x16xf32>
      %131 = arith.minimumf %130, %129 : vector<16x16xf32>
      %c5 = arith.constant 5 : index
      %c1_100 = arith.constant 1 : index
      %c0_101 = arith.constant 0 : index
      %132 = vector.load %arg10[%c5, %c1_100, %c0_101] : memref<6x18x16xf32, #tpu.memory_space<vmem>>, vector<1x16x16xf32>
      %133 = vector.shape_cast %132 : vector<1x16x16xf32> to vector<16x16xf32>
      %134 = vector.shape_cast %131 : vector<16x16xf32> to vector<1x16x16xf32>
      tpu.vector_store %arg10[%c5, %c1_100, %c0_101], %134 {strides = array<i32>} : memref<6x18x16xf32, #tpu.memory_space<vmem>>, vector<1x16x16xf32>,
    } else {
    }
    %c0_23 = arith.constant 0 : index
    %c0_24 = arith.constant 0 : index
    %c0_25 = arith.constant 0 : index
    %36 = vector.load %arg10[%c0_23, %c0_24, %c0_25] : memref<6x18x16xf32, #tpu.memory_space<vmem>>, vector<4x16x16xf32>
    %c0_26 = arith.constant 0 : index
    %c0_27 = arith.constant 0 : index
    %c0_28 = arith.constant 0 : index
    %37 = vector.load %arg5[%c0_26, %c0_27, %c0_28] : memref<3x3x16xf32, #tpu.memory_space<vmem>>, vector<1x1x16xf32>
    %38 = vector.shape_cast %37 : vector<1x1x16xf32> to vector<16xf32>
    %39 = vector.shape_cast %38 : vector<16xf32> to vector<1x1x16xf32>
    %40 = vector.broadcast %39 : vector<1x1x16xf32> to vector<4x16x16xf32>
    %41 = arith.mulf %36, %40 : vector<4x16x16xf32>
    %c0_29 = arith.constant 0 : index
    %c1_30 = arith.constant 1 : index
    %c0_31 = arith.constant 0 : index
    %42 = vector.load %arg10[%c0_29, %c1_30, %c0_31] : memref<6x18x16xf32, #tpu.memory_space<vmem>>, vector<4x16x16xf32>
    %c0_32 = arith.constant 0 : index
    %c1_33 = arith.constant 1 : index
    %c0_34 = arith.constant 0 : index
    %43 = vector.load %arg5[%c0_32, %c1_33, %c0_34] : memref<3x3x16xf32, #tpu.memory_space<vmem>>, vector<1x1x16xf32>
    %44 = vector.shape_cast %43 : vector<1x1x16xf32> to vector<16xf32>
    %45 = vector.shape_cast %44 : vector<16xf32> to vector<1x1x16xf32>
    %46 = vector.broadcast %45 : vector<1x1x16xf32> to vector<4x16x16xf32>
    %47 = arith.mulf %42, %46 : vector<4x16x16xf32>
    %48 = arith.addf %41, %47 : vector<4x16x16xf32>
    %c0_35 = arith.constant 0 : index
    %c2 = arith.constant 2 : index
    %c0_36 = arith.constant 0 : index
    %49 = vector.load %arg10[%c0_35, %c2, %c0_36] : memref<6x18x16xf32, #tpu.memory_space<vmem>>, vector<4x16x16xf32>
    %c0_37 = arith.constant 0 : index
    %c2_38 = arith.constant 2 : index
    %c0_39 = arith.constant 0 : index
    %50 = vector.load %arg5[%c0_37, %c2_38, %c0_39] : memref<3x3x16xf32, #tpu.memory_space<vmem>>, vector<1x1x16xf32>
    %51 = vector.shape_cast %50 : vector<1x1x16xf32> to vector<16xf32>
    %52 = vector.shape_cast %51 : vector<16xf32> to vector<1x1x16xf32>
    %53 = vector.broadcast %52 : vector<1x1x16xf32> to vector<4x16x16xf32>
    %54 = arith.mulf %49, %53 : vector<4x16x16xf32>
    %55 = arith.addf %48, %54 : vector<4x16x16xf32>
    %c1_40 = arith.constant 1 : index
    %c0_41 = arith.constant 0 : index
    %c0_42 = arith.constant 0 : index
    %56 = vector.load %arg10[%c1_40, %c0_41, %c0_42] : memref<6x18x16xf32, #tpu.memory_space<vmem>>, vector<4x16x16xf32>
    %c1_43 = arith.constant 1 : index
    %c0_44 = arith.constant 0 : index
    %c0_45 = arith.constant 0 : index
    %57 = vector.load %arg5[%c1_43, %c0_44, %c0_45] : memref<3x3x16xf32, #tpu.memory_space<vmem>>, vector<1x1x16xf32>
    %58 = vector.shape_cast %57 : vector<1x1x16xf32> to vector<16xf32>
    %59 = vector.shape_cast %58 : vector<16xf32> to vector<1x1x16xf32>
    %60 = vector.broadcast %59 : vector<1x1x16xf32> to vector<4x16x16xf32>
    %61 = arith.mulf %56, %60 : vector<4x16x16xf32>
    %62 = arith.addf %55, %61 : vector<4x16x16xf32>
    %c1_46 = arith.constant 1 : index
    %c1_47 = arith.constant 1 : index
    %c0_48 = arith.constant 0 : index
    %63 = vector.load %arg10[%c1_46, %c1_47, %c0_48] : memref<6x18x16xf32, #tpu.memory_space<vmem>>, vector<4x16x16xf32>
    %c1_49 = arith.constant 1 : index
    %c1_50 = arith.constant 1 : index
    %c0_51 = arith.constant 0 : index
    %64 = vector.load %arg5[%c1_49, %c1_50, %c0_51] : memref<3x3x16xf32, #tpu.memory_space<vmem>>, vector<1x1x16xf32>
    %65 = vector.shape_cast %64 : vector<1x1x16xf32> to vector<16xf32>
    %66 = vector.shape_cast %65 : vector<16xf32> to vector<1x1x16xf32>
    %67 = vector.broadcast %66 : vector<1x1x16xf32> to vector<4x16x16xf32>
    %68 = arith.mulf %63, %67 : vector<4x16x16xf32>
    %69 = arith.addf %62, %68 : vector<4x16x16xf32>
    %c1_52 = arith.constant 1 : index
    %c2_53 = arith.constant 2 : index
    %c0_54 = arith.constant 0 : index
    %70 = vector.load %arg10[%c1_52, %c2_53, %c0_54] : memref<6x18x16xf32, #tpu.memory_space<vmem>>, vector<4x16x16xf32>
    %c1_55 = arith.constant 1 : index
    %c2_56 = arith.constant 2 : index
    %c0_57 = arith.constant 0 : index
    %71 = vector.load %arg5[%c1_55, %c2_56, %c0_57] : memref<3x3x16xf32, #tpu.memory_space<vmem>>, vector<1x1x16xf32>
    %72 = vector.shape_cast %71 : vector<1x1x16xf32> to vector<16xf32>
    %73 = vector.shape_cast %72 : vector<16xf32> to vector<1x1x16xf32>
    %74 = vector.broadcast %73 : vector<1x1x16xf32> to vector<4x16x16xf32>
    %75 = arith.mulf %70, %74 : vector<4x16x16xf32>
    %76 = arith.addf %69, %75 : vector<4x16x16xf32>
    %c2_58 = arith.constant 2 : index
    %c0_59 = arith.constant 0 : index
    %c0_60 = arith.constant 0 : index
    %77 = vector.load %arg10[%c2_58, %c0_59, %c0_60] : memref<6x18x16xf32, #tpu.memory_space<vmem>>, vector<4x16x16xf32>
    %c2_61 = arith.constant 2 : index
    %c0_62 = arith.constant 0 : index
    %c0_63 = arith.constant 0 : index
    %78 = vector.load %arg5[%c2_61, %c0_62, %c0_63] : memref<3x3x16xf32, #tpu.memory_space<vmem>>, vector<1x1x16xf32>
    %79 = vector.shape_cast %78 : vector<1x1x16xf32> to vector<16xf32>
    %80 = vector.shape_cast %79 : vector<16xf32> to vector<1x1x16xf32>
    %81 = vector.broadcast %80 : vector<1x1x16xf32> to vector<4x16x16xf32>
    %82 = arith.mulf %77, %81 : vector<4x16x16xf32>
    %83 = arith.addf %76, %82 : vector<4x16x16xf32>
    %c2_64 = arith.constant 2 : index
    %c1_65 = arith.constant 1 : index
    %c0_66 = arith.constant 0 : index
    %84 = vector.load %arg10[%c2_64, %c1_65, %c0_66] : memref<6x18x16xf32, #tpu.memory_space<vmem>>, vector<4x16x16xf32>
    %c2_67 = arith.constant 2 : index
    %c1_68 = arith.constant 1 : index
    %c0_69 = arith.constant 0 : index
    %85 = vector.load %arg5[%c2_67, %c1_68, %c0_69] : memref<3x3x16xf32, #tpu.memory_space<vmem>>, vector<1x1x16xf32>
    %86 = vector.shape_cast %85 : vector<1x1x16xf32> to vector<16xf32>
    %87 = vector.shape_cast %86 : vector<16xf32> to vector<1x1x16xf32>
    %88 = vector.broadcast %87 : vector<1x1x16xf32> to vector<4x16x16xf32>
    %89 = arith.mulf %84, %88 : vector<4x16x16xf32>
    %90 = arith.addf %83, %89 : vector<4x16x16xf32>
    %c2_70 = arith.constant 2 : index
    %c2_71 = arith.constant 2 : index
    %c0_72 = arith.constant 0 : index
    %91 = vector.load %arg10[%c2_70, %c2_71, %c0_72] : memref<6x18x16xf32, #tpu.memory_space<vmem>>, vector<4x16x16xf32>
    %c2_73 = arith.constant 2 : index
    %c2_74 = arith.constant 2 : index
    %c0_75 = arith.constant 0 : index
    %92 = vector.load %arg5[%c2_73, %c2_74, %c0_75] : memref<3x3x16xf32, #tpu.memory_space<vmem>>, vector<1x1x16xf32>
    %93 = vector.shape_cast %92 : vector<1x1x16xf32> to vector<16xf32>
    %94 = vector.shape_cast %93 : vector<16xf32> to vector<1x1x16xf32>
    %95 = vector.broadcast %94 : vector<1x1x16xf32> to vector<4x16x16xf32>
    %96 = arith.mulf %91, %95 : vector<4x16x16xf32>
    %97 = arith.addf %90, %96 : vector<4x16x16xf32>
    %c0_76 = arith.constant 0 : index
    %c0_77 = arith.constant 0 : index
    %98 = vector.load %arg6[%c0_76, %c0_77] : memref<1x16xf32, #tpu.memory_space<vmem>>, vector<1x16xf32>
    %99 = vector.shape_cast %98 : vector<1x16xf32> to vector<16xf32>
    %100 = vector.shape_cast %99 : vector<16xf32> to vector<1x1x16xf32>
    %101 = vector.broadcast %100 : vector<1x1x16xf32> to vector<4x16x16xf32>
    %102 = arith.addf %97, %101 : vector<4x16x16xf32>
    %cst_78 = arith.constant 0.000000e+00 : f32
    %cst_79 = arith.constant 6.000000e+00 : f32
    %103 = vector.broadcast %cst_78 : f32 to vector<4x16x16xf32>
    %104 = arith.maximumf %103, %102 : vector<4x16x16xf32>
    %105 = vector.broadcast %cst_79 : f32 to vector<4x16x16xf32>
    %106 = arith.minimumf %105, %104 : vector<4x16x16xf32>
    %107 = vector.shape_cast %106 : vector<4x16x16xf32> to vector<64x16xf32>
    %c0_80 = arith.constant 0 : index
    %c0_81 = arith.constant 0 : index
    %108 = vector.load %arg7[%c0_80, %c0_81] : memref<16x8xf32, #tpu.memory_space<vmem>>, vector<16x8xf32>
    %cst_82 = arith.constant dense<0.000000e+00> : vector<64x8xf32>
    %109 = tpu.matmul %107, %108, %cst_82 {dimension_numbers = #tpu.dot_dimension_numbers<[1], [0], [0], [1], [0, 0, 1, 1], [], []>} : vector<64x16xf32>, vector<16x8xf32>, vector<64x8xf32> -> vector<64x8xf32>
    %c0_83 = arith.constant 0 : index
    %c0_84 = arith.constant 0 : index
    %110 = vector.load %arg8[%c0_83, %c0_84] : memref<1x8xf32, #tpu.memory_space<vmem>>, vector<1x8xf32>
    %111 = vector.broadcast %110 : vector<1x8xf32> to vector<64x8xf32>
    %112 = arith.addf %109, %111 : vector<64x8xf32>
    %113 = arith.addf %112, %4 : vector<64x8xf32>
    %114 = vector.shape_cast %113 : vector<64x8xf32> to vector<4x16x8xf32>
    %c0_85 = arith.constant 0 : index
    %c0_86 = arith.constant 0 : index
    %c0_87 = arith.constant 0 : index
    %c0_88 = arith.constant 0 : index
    %115 = vector.load %arg9[%c0_85, %c0_86, %c0_87, %c0_88] : memref<1x4x16x8xf32, #tpu.memory_space<vmem>>, vector<1x4x16x8xf32>
    %116 = vector.shape_cast %115 : vector<1x4x16x8xf32> to vector<4x16x8xf32>
    %117 = vector.shape_cast %114 : vector<4x16x8xf32> to vector<1x4x16x8xf32>
    tpu.vector_store %arg9[%c0_85, %c0_86, %c0_87, %c0_88], %117 {strides = array<i32>} : memref<1x4x16x8xf32, #tpu.memory_space<vmem>>, vector<1x4x16x8xf32>,
    return
  }
  func.func @transform_0(%arg0: i32, %arg1: i32) -> (i32, i32, i32, i32) {
    %c0_i32 = arith.constant 0 : i32
    %c0_i32_0 = arith.constant 0 : i32
    %c0_i32_1 = arith.constant 0 : i32
    %c0_i32_2 = arith.constant 0 : i32
    return %arg0, %c0_i32, %c0_i32_0, %c0_i32_1 : i32, i32, i32, i32
  }
  func.func @transform_1(%arg0: i32, %arg1: i32) -> (i32, i32) {
    %c0_i32 = arith.constant 0 : i32
    %c0_i32_0 = arith.constant 0 : i32
    %c0_i32_1 = arith.constant 0 : i32
    return %c0_i32, %c0_i32_0 : i32, i32
  }
  func.func @transform_2(%arg0: i32, %arg1: i32) -> (i32, i32) {
    %c0_i32 = arith.constant 0 : i32
    %c0_i32_0 = arith.constant 0 : i32
    %c0_i32_1 = arith.constant 0 : i32
    return %c0_i32, %c0_i32_0 : i32, i32
  }
  func.func @transform_3(%arg0: i32, %arg1: i32) -> (i32, i32, i32) {
    %c0_i32 = arith.constant 0 : i32
    %c0_i32_0 = arith.constant 0 : i32
    %c0_i32_1 = arith.constant 0 : i32
    %c0_i32_2 = arith.constant 0 : i32
    return %c0_i32, %c0_i32_0, %c0_i32_1 : i32, i32, i32
  }
  func.func @transform_4(%arg0: i32, %arg1: i32) -> (i32, i32) {
    %c0_i32 = arith.constant 0 : i32
    %c0_i32_0 = arith.constant 0 : i32
    %c0_i32_1 = arith.constant 0 : i32
    return %c0_i32, %c0_i32_0 : i32, i32
  }
  func.func @transform_5(%arg0: i32, %arg1: i32) -> (i32, i32) {
    %c0_i32 = arith.constant 0 : i32
    %c0_i32_0 = arith.constant 0 : i32
    %c0_i32_1 = arith.constant 0 : i32
    return %c0_i32, %c0_i32_0 : i32, i32
  }
  func.func @transform_6(%arg0: i32, %arg1: i32) -> (i32, i32) {
    %c0_i32 = arith.constant 0 : i32
    %c0_i32_0 = arith.constant 0 : i32
    %c0_i32_1 = arith.constant 0 : i32
    return %c0_i32, %c0_i32_0 : i32, i32
  }
  func.func @transform_7(%arg0: i32, %arg1: i32) -> (i32, i32, i32, i32) {
    %c0_i32 = arith.constant 0 : i32
    %c0_i32_0 = arith.constant 0 : i32
    %c0_i32_1 = arith.constant 0 : i32
    return %arg0, %arg1, %c0_i32, %c0_i32_0 : i32, i32, i32, i32
  }
}

</mosaic_0001>

<llo_original>
// kernel: tpu_custom_call.1
$region0: #{tpu_custom_call.1}
  #allocation0 [shape = 'u32[]', space=smem, size = 0x4, offset = 0x4, fixed_abs, tag = 'smem constant byte address 0x4 - core index']
  #allocation1 [shape = 'u32[144,128]{1,0:T(1,128)}', space=vmem, size = 0x12000, scoped, tag = 'internal scratch']
  #allocation2 [shape = 'f32[6,18,16]{2,1,0:T(8,128)}', space=vmem, size = 0x12000, scoped, tag = 'scratch operand']
  %s0 = inlined_call_operand.vmem [shape: f32[2,16,16,8], index: 0, kind: input, shape index: {}]
  %s1 = inlined_call_operand.vmem [shape: f32[8,16], index: 1, kind: input, shape index: {}]
  %s2 = inlined_call_operand.vmem [shape: f32[1,16], index: 2, kind: input, shape index: {}]
  %s3 = inlined_call_operand.vmem [shape: f32[3,3,16], index: 3, kind: input, shape index: {}]
  %s4 = inlined_call_operand.vmem [shape: f32[1,16], index: 4, kind: input, shape index: {}]
  %s5 = inlined_call_operand.vmem [shape: f32[16,8], index: 5, kind: input, shape index: {}]
  %s6 = inlined_call_operand.vmem [shape: f32[1,8], index: 6, kind: input, shape index: {}]
  %s7 = inlined_call_operand.vmem [shape: f32[2,16,16,8], index: 7, kind: output, shape index: {}]
  %s8 = sld [smem:[#allocation0]]
  $region77: #{tpu_custom_call.1} parent=0
    _
  %s10 = ssub.s32 1, %s8
  %s11 = scalar_select 0, %s10, %s8
  loop: start=0, step=1, limit=10
  $region2: #{tpu_custom_call.1} parent=0 // loop_pre_header
    _
  $region3: #{tpu_custom_call.1} parent=0 // loop_header
    %s13 = sphi 0, %s17
    %p14 = scmp.ge.s32.totalorder %s13, 10
    %s20 = sphi 0, %s32
    %s21 = sphi 0, %s28
    %s22 = sphi 0, %s20
    %s23 = sphi 0, %s21
    %s24 = sphi 0, %s22
    %s25 = sphi 0, %s23
    %s35 = sphi 0, %s37
    %s38 = sphi 0, %s35
    %s39 = sphi 0, %s38
    %s55 = sphi 0, %s39
    %s59 = sphi 0, %s59
    %s61 = sphi 0, %s59
    %s62 = sphi 0, %s61
    %s76 = sphi 0, %s62
    %s80 = sphi 0, %s80
    %s82 = sphi 0, %s80
    %s83 = sphi 0, %s82
    %s97 = sphi 0, %s83
    %s101 = sphi 0, %s101
    %s103 = sphi 0, %s101
    %s104 = sphi 0, %s103
    %s118 = sphi 0, %s104
    %s122 = sphi 0, %s122
    %s124 = sphi 0, %s122
    %s125 = sphi 0, %s124
    %s139 = sphi 0, %s125
    %s143 = sphi 0, %s143
    %s145 = sphi 0, %s143
    %s146 = sphi 0, %s145
    %s160 = sphi 0, %s146
    %s164 = sphi 0, %s164
    %s166 = sphi 0, %s164
    %s167 = sphi 0, %s166
    %s181 = sphi 0, %s167
    %s189 = sphi 0, %s191
    %s192 = sphi 0, %s189
    %s193 = sphi 0, %s192
    %s209 = sphi 0, %s193
  $region4: #{tpu_custom_call.1} parent=0 // loop_header_branch
    %16 = sbr.rel (%p14) target = $region8
  $region5: #{tpu_custom_call.1} parent=0 // loop_body
    %s18 = ssub.s32 %s13, 1
    %s19 = ssub.s32 %s13, 2
    %s26 = sadd.s32 1, %s21
    %p27 = scmp.ge.s32.totalorder %s26, 4
    %s28 = scalar_select %p27, 0, %s26
    %s29 = sadd.s32 1, %s20
    %s30 = scalar_select %p27, %s29, %s20
    %p31 = scmp.ge.s32.totalorder %s30, 2
    %s32 = scalar_select %p31, 0, %s30
    %s33 = ssub.s32 %s20, %s32
    %p34 = scmp.eq.s32.totalorder %s33, 0
    %s36 = sadd.s32 %s35, 1
    %s37 = scalar_select %p34, %s35, %s36
    %p40 = pneg %p34
    %p41 = scmp.eq.s32.totalorder %s13, 7
    %p42 = por %p40, %p41
    %p43 = scmp.ne.s32.totalorder %s35, %s38
    %p44 = scmp.eq.s32.totalorder %s13, 0
    %p45 = por %p43, %p44
    %p46 = scmp.ne.s32.totalorder %s35, %s38
    %p47 = scmp.eq.s32.totalorder %s18, 7
    %p48 = por %p46, %p47
    %p49 = scmp.ne.s32.totalorder %s38, %s39
    %p50 = scmp.eq.s32.totalorder %s18, 0
    %p51 = por %p49, %p50
    %p52 = scmp.ne.s32.totalorder %s38, %s39
    %p53 = scmp.eq.s32.totalorder %s19, 7
    %p54 = por %p52, %p53
    %p56 = scmp.ne.s32.totalorder %s39, %s55
    %p57 = scmp.eq.s32.totalorder %s19, 0
    %p58 = por %p56, %p57
    %s60 = sadd.s32 %s59, 1
    %p63 = scmp.eq.s32.totalorder %s13, 7
    %p64 = scmp.ne.s32.totalorder %s59, %s61
    %p65 = scmp.eq.s32.totalorder %s13, 0
    %p66 = por %p64, %p65
    %p67 = scmp.ne.s32.totalorder %s59, %s61
    %p68 = scmp.eq.s32.totalorder %s18, 7
    %p69 = por %p67, %p68
    %p70 = scmp.ne.s32.totalorder %s61, %s62
    %p71 = scmp.eq.s32.totalorder %s18, 0
    %p72 = por %p70, %p71
    %p73 = scmp.ne.s32.totalorder %s61, %s62
    %p74 = scmp.eq.s32.totalorder %s19, 7
    %p75 = por %p73, %p74
    %p77 = scmp.ne.s32.totalorder %s62, %s76
    %p78 = scmp.eq.s32.totalorder %s19, 0
    %p79 = por %p77, %p78
    %s81 = sadd.s32 %s80, 1
    %p84 = scmp.eq.s32.totalorder %s13, 7
    %p85 = scmp.ne.s32.totalorder %s80, %s82
    %p86 = scmp.eq.s32.totalorder %s13, 0
    %p87 = por %p85, %p86
    %p88 = scmp.ne.s32.totalorder %s80, %s82
    %p89 = scmp.eq.s32.totalorder %s18, 7
    %p90 = por %p88, %p89
    %p91 = scmp.ne.s32.totalorder %s82, %s83
    %p92 = scmp.eq.s32.totalorder %s18, 0
    %p93 = por %p91, %p92
    %p94 = scmp.ne.s32.totalorder %s82, %s83
    %p95 = scmp.eq.s32.totalorder %s19, 7
    %p96 = por %p94, %p95
    %p98 = scmp.ne.s32.totalorder %s83, %s97
    %p99 = scmp.eq.s32.totalorder %s19, 0
    %p100 = por %p98, %p99
    %s102 = sadd.s32 %s101, 1
    %p105 = scmp.eq.s32.totalorder %s13, 7
    %p106 = scmp.ne.s32.totalorder %s101, %s103
    %p107 = scmp.eq.s32.totalorder %s13, 0
    %p108 = por %p106, %p107
    %p109 = scmp.ne.s32.totalorder %s101, %s103
    %p110 = scmp.eq.s32.totalorder %s18, 7
    %p111 = por %p109, %p110
    %p112 = scmp.ne.s32.totalorder %s103, %s104
    %p113 = scmp.eq.s32.totalorder %s18, 0
    %p114 = por %p112, %p113
    %p115 = scmp.ne.s32.totalorder %s103, %s104
    %p116 = scmp.eq.s32.totalorder %s19, 7
    %p117 = por %p115, %p116
    %p119 = scmp.ne.s32.totalorder %s104, %s118
    %p120 = scmp.eq.s32.totalorder %s19, 0
    %p121 = por %p119, %p120
    %s123 = sadd.s32 %s122, 1
    %p126 = scmp.eq.s32.totalorder %s13, 7
    %p127 = scmp.ne.s32.totalorder %s122, %s124
    %p128 = scmp.eq.s32.totalorder %s13, 0
    %p129 = por %p127, %p128
    %p130 = scmp.ne.s32.totalorder %s122, %s124
    %p131 = scmp.eq.s32.totalorder %s18, 7
    %p132 = por %p130, %p131
    %p133 = scmp.ne.s32.totalorder %s124, %s125
    %p134 = scmp.eq.s32.totalorder %s18, 0
    %p135 = por %p133, %p134
    %p136 = scmp.ne.s32.totalorder %s124, %s125
    %p137 = scmp.eq.s32.totalorder %s19, 7
    %p138 = por %p136, %p137
    %p140 = scmp.ne.s32.totalorder %s125, %s139
    %p141 = scmp.eq.s32.totalorder %s19, 0
    %p142 = por %p140, %p141
    %s144 = sadd.s32 %s143, 1
    %p147 = scmp.eq.s32.totalorder %s13, 7
    %p148 = scmp.ne.s32.totalorder %s143, %s145
    %p149 = scmp.eq.s32.totalorder %s13, 0
    %p150 = por %p148, %p149
    %p151 = scmp.ne.s32.totalorder %s143, %s145
    %p152 = scmp.eq.s32.totalorder %s18, 7
    %p153 = por %p151, %p152
    %p154 = scmp.ne.s32.totalorder %s145, %s146
    %p155 = scmp.eq.s32.totalorder %s18, 0
    %p156 = por %p154, %p155
    %p157 = scmp.ne.s32.totalorder %s145, %s146
    %p158 = scmp.eq.s32.totalorder %s19, 7
    %p159 = por %p157, %p158
    %p161 = scmp.ne.s32.totalorder %s146, %s160
    %p162 = scmp.eq.s32.totalorder %s19, 0
    %p163 = por %p161, %p162
    %s165 = sadd.s32 %s164, 1
    %p168 = scmp.eq.s32.totalorder %s13, 7
    %p169 = scmp.ne.s32.totalorder %s164, %s166
    %p170 = scmp.eq.s32.totalorder %s13, 0
    %p171 = por %p169, %p170
    %p172 = scmp.ne.s32.totalorder %s164, %s166
    %p173 = scmp.eq.s32.totalorder %s18, 7
    %p174 = por %p172, %p173
    %p175 = scmp.ne.s32.totalorder %s166, %s167
    %p176 = scmp.eq.s32.totalorder %s18, 0
    %p177 = por %p175, %p176
    %p178 = scmp.ne.s32.totalorder %s166, %s167
    %p179 = scmp.eq.s32.totalorder %s19, 7
    %p180 = por %p178, %p179
    %p182 = scmp.ne.s32.totalorder %s167, %s181
    %p183 = scmp.eq.s32.totalorder %s19, 0
    %p184 = por %p182, %p183
    %s185 = ssub.s32 %s20, %s32
    %s186 = ssub.s32 %s21, %s28
    %s187 = sor.u32 %s185, %s186
    %p188 = scmp.eq.s32.totalorder %s187, 0
    %s190 = sadd.s32 %s189, 1
    %s191 = scalar_select %p188, %s189, %s190
    %p194 = pneg %p188
    %p195 = scmp.eq.s32.totalorder %s13, 7
    %p196 = por %p194, %p195
    %p197 = scmp.ne.s32.totalorder %s189, %s192
    %p198 = scmp.eq.s32.totalorder %s13, 0
    %p199 = por %p197, %p198
    %p200 = scmp.ne.s32.totalorder %s189, %s192
    %p201 = scmp.eq.s32.totalorder %s18, 7
    %p202 = por %p200, %p201
    %p203 = scmp.ne.s32.totalorder %s192, %s193
    %p204 = scmp.eq.s32.totalorder %s18, 0
    %p205 = por %p203, %p204
    %p206 = scmp.ne.s32.totalorder %s192, %s193
    %p207 = scmp.eq.s32.totalorder %s19, 7
    %p208 = por %p206, %p207
    %p210 = scmp.ne.s32.totalorder %s193, %s209
    %p211 = scmp.eq.s32.totalorder %s19, 0
    %p212 = por %p210, %p211
    %p213 = scmp.le.s32.totalorder 1, %s13
    %p214 = scmp.lt.s32.totalorder %s13, 9
    %p215 = pnand %p213, %p214
    %p216 = pneg %p215
    // Predicated region
    $region9: #{tpu_custom_call.1} parent=5 // pred_check
      _
    $region10: #{tpu_custom_call.1} parent=5 // pred_check_branch
      %218 = sbr.rel (%p215) target = $region12
    $region11: #{tpu_custom_call.1} parent=5 // pred_region
      %s219 = ssub.s32 %s13, 1
      // Predicated region
      $region13: #{tpu_custom_call.1} parent=11 // pred_check
        %p220 = pneg %p72
      $region14: #{tpu_custom_call.1} parent=11 // pred_check_branch
        %222 = sbr.rel (%p220) target = $region16
      $region15: #{tpu_custom_call.1} parent=11 // pred_region
        _
      $region16: #{tpu_custom_call.1} parent=11 // pred_fallthru
        _
      // Predicated region
      $region17: #{tpu_custom_call.1} parent=11 // pred_check
        %p223 = pneg %p93
      $region18: #{tpu_custom_call.1} parent=11 // pred_check_branch
        %225 = sbr.rel (%p223) target = $region20
      $region19: #{tpu_custom_call.1} parent=11 // pred_region
        _
      $region20: #{tpu_custom_call.1} parent=11 // pred_fallthru
        _
      // Predicated region
      $region21: #{tpu_custom_call.1} parent=11 // pred_check
        %p226 = pneg %p114
      $region22: #{tpu_custom_call.1} parent=11 // pred_check_branch
        %228 = sbr.rel (%p226) target = $region24
      $region23: #{tpu_custom_call.1} parent=11 // pred_region
        _
      $region24: #{tpu_custom_call.1} parent=11 // pred_fallthru
        _
      // Predicated region
      $region25: #{tpu_custom_call.1} parent=11 // pred_check
        %p229 = pneg %p135
      $region26: #{tpu_custom_call.1} parent=11 // pred_check_branch
        %231 = sbr.rel (%p229) target = $region28
      $region27: #{tpu_custom_call.1} parent=11 // pred_region
        _
      $region28: #{tpu_custom_call.1} parent=11 // pred_fallthru
        _
      // Predicated region
      $region29: #{tpu_custom_call.1} parent=11 // pred_check
        %p232 = pneg %p156
      $region30: #{tpu_custom_call.1} parent=11 // pred_check_branch
        %234 = sbr.rel (%p232) target = $region32
      $region31: #{tpu_custom_call.1} parent=11 // pred_region
        _
      $region32: #{tpu_custom_call.1} parent=11 // pred_fallthru
        _
      // Predicated region
      $region33: #{tpu_custom_call.1} parent=11 // pred_check
        %p235 = pneg %p177
      $region34: #{tpu_custom_call.1} parent=11 // pred_check_branch
        %237 = sbr.rel (%p235) target = $region36
      $region35: #{tpu_custom_call.1} parent=11 // pred_region
        _
      $region36: #{tpu_custom_call.1} parent=11 // pred_fallthru
        _
    $region12: #{tpu_custom_call.1} parent=5 // pred_fallthru
      _
    %p238 = scmp.lt.s32.totalorder %s13, 8
    // Predicated region
    $region37: #{tpu_custom_call.1} parent=5 // pred_check
      %p239 = pneg %p238
    $region38: #{tpu_custom_call.1} parent=5 // pred_check_branch
      %241 = sbr.rel (%p239) target = $region40
    $region39: #{tpu_custom_call.1} parent=5 // pred_region
      // Predicated region
      $region41: #{tpu_custom_call.1} parent=39 // pred_check
        %p242 = pneg %p45
      $region42: #{tpu_custom_call.1} parent=39 // pred_check_branch
        %244 = sbr.rel (%p242) target = $region44
      $region43: #{tpu_custom_call.1} parent=39 // pred_region
        %p245 = scmp.lt.s32.totalorder %s20, 1
        %s246 = scalar_select %p245, %s20, 1
        %s247 = smul.addr %s246, 32
        %s248 = smul.addr %s247, 8
        %s249 = scalar_lea.vmem %s0, %s248
      $region44: #{tpu_custom_call.1} parent=39 // pred_fallthru
        _
    $region40: #{tpu_custom_call.1} parent=5 // pred_fallthru
      _
    %p250 = scmp.le.s32.totalorder 1, %s13
    %p251 = scmp.lt.s32.totalorder %s13, 9
    %p252 = pnand %p250, %p251
    %p253 = pneg %p252
    // Predicated region
    $region45: #{tpu_custom_call.1} parent=5 // pred_check
      _
    $region46: #{tpu_custom_call.1} parent=5 // pred_check_branch
      %255 = sbr.rel (%p252) target = $region48
    $region47: #{tpu_custom_call.1} parent=5 // pred_region
      %s256 = ssub.s32 %s13, 1
      %p257 = scmp.lt.s32.totalorder %s22, 1
      %s258 = scalar_select %p257, %s22, 1
      %s259 = smul.addr %s258, 32
      %s260 = smul.addr %s259, 8
      %s261 = scalar_lea.vmem %s0, %s260
      %p262 = pneg %p51
      %p263 = pneg %p48
      %p264 = pneg %p72
      %p265 = pneg %p69
      %p266 = pneg %p93
      %p267 = pneg %p90
      %p268 = pneg %p114
      %p269 = pneg %p111
      %p270 = pneg %p135
      %p271 = pneg %p132
      %p272 = pneg %p156
      %p273 = pneg %p153
      %p274 = pneg %p177
      %p275 = pneg %p174
      %p276 = pneg %p205
      %p277 = pneg %p202
      %s278 = smul.u32 4, %s23
      %p279 = scmp.lt.s32.totalorder %s22, 1
      %s280 = scalar_select %p279, %s22, 1
      %p281 = scmp.lt.s32.totalorder %s278, 15
      %s282 = scalar_select %p281, %s278, 15
      %s283 = smul.addr %s282, 2
      %s284 = smul.addr %s280, 32
      %s285 = sadd.s32 %s283, %s284
      %s286 = smul.addr %s285, 8
      %s287 = scalar_lea.vmem %s7, %s286
      %p288 = scmp.lt.s32.totalorder %s22, 1
      %s289 = scalar_select %p288, %s22, 1
      %s290 = smul.addr %s289, 32
      %s291 = smul.addr %s290, 8
      %s292 = scalar_lea.vmem %s0, %s291
      %s293 = smul.u32 4, %s23
      %p294 = scmp.lt.s32.totalorder %s22, 1
      %s295 = scalar_select %p294, %s22, 1
      %p296 = scmp.lt.s32.totalorder %s293, 15
      %s297 = scalar_select %p296, %s293, 15
      %s298 = smul.addr %s297, 2
      %s299 = smul.addr %s295, 32
      %s300 = sadd.s32 %s298, %s299
      %s301 = smul.addr %s300, 8
      %s302 = scalar_lea.vmem %s7, %s301
      %s303 = smul.u32 4, %s23
      %s304 = smul.u32 %s23, 4
      %s305 = smul.u32 %s304, 16
      %s306 = scalar_lea.vmem %s292, %s305
      %v307 = vld [vmem:[%s306] sm:$0xff]
      %v308 = vld [vmem:[%s306 + $0x8] sm:$0xff]
      %v309 = vld [vmem:[%s306 + $0x10] sm:$0xff]
      %v310 = vld [vmem:[%s306 + $0x18] sm:$0xff]
      %v311 = vld [vmem:[%s306 + $0x20] sm:$0xff]
      %v312 = vld [vmem:[%s306 + $0x28] sm:$0xff]
      %v313 = vld [vmem:[%s306 + $0x30] sm:$0xff]
      %v314 = vld [vmem:[%s306 + $0x38] sm:$0xff]
      %v315 = vld [vmem:[%s1] sm:$0xff]
      %v316 = vld [vmem:[%s2] sm:$0x1]
      %v318 = vlaneseq
      %v319 = vshrl.u32 %v318, 7
      %v320 = vsub.s32 0, %v319
      %v321 = vrot.slane %v316, %v320
      %vm323 = vcmask 64512
      %v325 = vsel %vm323, %v307, 0
      %v328 = vsel %vm323, %v308, 0
      %v331 = vsel %vm323, %v309, 0
      %v334 = vsel %vm323, %v310, 0
      %v337 = vsel %vm323, %v311, 0
      %v340 = vsel %vm323, %v312, 0
      %v343 = vsel %vm323, %v313, 0
      %v346 = vsel %vm323, %v314, 0
      %348 = vmatprep.subr.mxu0 0.0
      %349 = vmatpush1.msra.mxu0 %v315
      %350 = vmatprep.subr.mxu0 0.0
      %351 = vmatpush1.msra.mxu0 0.0
      %352 = vmatprep.subr.mxu0 0.0
      %353 = vmatpush1.msra.mxu0 0.0
      %354 = vmatprep.subr.mxu0 0.0
      %355 = vmatpush1.msra.mxu0 0.0
      %356 = vmatprep.subr.mxu0 0.0
      %357 = vmatpush1.msra.mxu0 0.0
      %358 = vmatprep.subr.mxu0 0.0
      %359 = vmatpush1.msra.mxu0 0.0
      %360 = vmatprep.subr.mxu0 0.0
      %361 = vmatpush1.msra.mxu0 0.0
      %362 = vmatprep.subr.mxu0 0.0
      %363 = vmatpush1.msra.mxu0 0.0
      %364 = vmatprep.subr.mxu0 0.0
      %365 = vmatpush1.msra.mxu0 0.0
      %366 = vmatprep.subr.mxu0 0.0
      %367 = vmatpush1.msra.mxu0 0.0
      %368 = vmatprep.subr.mxu0 0.0
      %369 = vmatpush1.msra.mxu0 0.0
      %370 = vmatprep.subr.mxu0 0.0
      %371 = vmatpush1.msra.mxu0 0.0
      %372 = vmatprep.subr.mxu0 0.0
      %373 = vmatpush1.msra.mxu0 0.0
      %374 = vmatprep.subr.mxu0 0.0
      %375 = vmatpush1.msra.mxu0 0.0
      %376 = vmatprep.subr.mxu0 0.0
      %377 = vmatpush1.msra.mxu0 0.0
      %378 = vmatprep.subr.mxu0 0.0
      %379 = vmatpush1.msra.mxu0 0.0
      %380 = vmatprep.subr.mxu0 0.0
      %381 = vmatpush1.msra.mxu0 0.0
      %382 = vmatprep.subr.mxu0 0.0
      %383 = vmatpush1.msra.mxu0 0.0
      %384 = vmatprep.subr.mxu0 0.0
      %385 = vmatpush1.msra.mxu0 0.0
      %386 = vmatprep.subr.mxu0 0.0
      %387 = vmatpush1.msra.mxu0 0.0
      %388 = vmatprep.subr.mxu0 0.0
      %389 = vmatpush1.msra.mxu0 0.0
      %390 = vmatprep.subr.mxu0 0.0
      %391 = vmatpush1.msra.mxu0 0.0
      %392 = vmatprep.subr.mxu0 0.0
      %393 = vmatpush1.msra.mxu0 0.0
      %394 = vmatprep.subr.mxu0 0.0
      %395 = vmatpush1.msra.mxu0 0.0
      %396 = vmatprep.subr.mxu0 0.0
      %397 = vmatpush1.msra.mxu0 0.0
      %398 = vmatprep.subr.mxu0 0.0
      %399 = vmatpush1.msra.mxu0 0.0
      %400 = vmatprep.subr.mxu0 0.0
      %401 = vmatpush1.msra.mxu0 0.0
      %402 = vmatprep.subr.mxu0 0.0
      %403 = vmatpush1.msra.mxu0 0.0
      %404 = vmatprep.subr.mxu0 0.0
      %405 = vmatpush1.msra.mxu0 0.0
      %406 = vmatprep.subr.mxu0 0.0
      %407 = vmatpush1.msra.mxu0 0.0
      %408 = vmatprep.subr.mxu0 0.0
      %409 = vmatpush1.msra.mxu0 0.0
      %410 = vmatprep.subr.mxu0 0.0
      %411 = vmatpush1.msra.mxu0 0.0
      %412 = vmatprep.mubr.f32.mxu0 0.0
      %413 = vmatmul.mubr.f32.gmra.mrb[0].mxu0 %v325
      %v414 = vpop.f32.mrb[0].mxu0
      %v415 = vadd.f32 %v321, %v414
      %v416 = vpop.f32.mrb[0].mxu0
      %417 = vmatprep.mubr.f32.mxu0 0.0
      %418 = vmatmul.mubr.f32.gmra.mrb[0].mxu0 %v328
      %v419 = vpop.f32.mrb[0].mxu0
      %v420 = vadd.f32 %v321, %v419
      %v421 = vpop.f32.mrb[0].mxu0
      %422 = vmatprep.mubr.f32.mxu0 0.0
      %423 = vmatmul.mubr.f32.gmra.mrb[0].mxu0 %v331
      %v424 = vpop.f32.mrb[0].mxu0
      %v425 = vadd.f32 %v321, %v424
      %v426 = vpop.f32.mrb[0].mxu0
      %427 = vmatprep.mubr.f32.mxu0 0.0
      %428 = vmatmul.mubr.f32.gmra.mrb[0].mxu0 %v334
      %v429 = vpop.f32.mrb[0].mxu0
      %v430 = vadd.f32 %v321, %v429
      %v431 = vpop.f32.mrb[0].mxu0
      %432 = vmatprep.mubr.f32.mxu0 0.0
      %433 = vmatmul.mubr.f32.gmra.mrb[0].mxu0 %v337
      %v434 = vpop.f32.mrb[0].mxu0
      %v435 = vadd.f32 %v321, %v434
      %v436 = vpop.f32.mrb[0].mxu0
      %437 = vmatprep.mubr.f32.mxu0 0.0
      %438 = vmatmul.mubr.f32.gmra.mrb[0].mxu0 %v340
      %v439 = vpop.f32.mrb[0].mxu0
      %v440 = vadd.f32 %v321, %v439
      %v441 = vpop.f32.mrb[0].mxu0
      %442 = vmatprep.mubr.f32.mxu0 0.0
      %443 = vmatmul.mubr.f32.gmra.mrb[0].mxu0 %v343
      %v444 = vpop.f32.mrb[0].mxu0
      %v445 = vadd.f32 %v321, %v444
      %v446 = vpop.f32.mrb[0].mxu0
      %447 = vmatprep.mubr.f32.mxu0 0.0
      %448 = vmatmul.mubr.f32.gmra.mrb[0].mxu0 %v346
      %v449 = vpop.f32.mrb[0].mxu0
      %v450 = vadd.f32 %v321, %v449
      %v451 = vpop.f32.mrb[0].mxu0
      %452 = vdwg.mxu0
      %v453 = vmax.f32 %v415, 0.0
      %v454 = vmax.f32 %v420, 0.0
      %v455 = vmax.f32 %v425, 0.0
      %v456 = vmax.f32 %v430, 0.0
      %v457 = vmax.f32 %v435, 0.0
      %v458 = vmax.f32 %v440, 0.0
      %v459 = vmax.f32 %v445, 0.0
      %v460 = vmax.f32 %v450, 0.0
      %v461 = vmin.f32 %v453, 6.0
      %v462 = vmin.f32 %v454, 6.0
      %v463 = vmin.f32 %v455, 6.0
      %v464 = vmin.f32 %v456, 6.0
      %v465 = vmin.f32 %v457, 6.0
      %v466 = vmin.f32 %v458, 6.0
      %v467 = vmin.f32 %v459, 6.0
      %v468 = vmin.f32 %v460, 6.0
      %vm469 = vcmask 122880
      %470 = vst.msk [vmem:[#allocation2] sm:$0x1] %vm469, 0.0
      %471 = vst.msk [vmem:[#allocation2 + $0x18] sm:$0x1] %vm469, 0.0
      %472 = vst.msk [vmem:[#allocation2 + $0x30] sm:$0x1] %vm469, 0.0
      %473 = vst.msk [vmem:[#allocation2 + $0x48] sm:$0x1] %vm469, 0.0
      %474 = vst.msk [vmem:[#allocation2 + $0x60] sm:$0x1] %vm469, 0.0
      %475 = vst.msk [vmem:[#allocation2 + $0x78] sm:$0x1] %vm469, 0.0
      %476 = vst.msk [vmem:[#allocation2 + $0x11] sm:$0x1] %vm469, 0.0
      %477 = vst.msk [vmem:[#allocation2 + $0x29] sm:$0x1] %vm469, 0.0
      %478 = vst.msk [vmem:[#allocation2 + $0x41] sm:$0x1] %vm469, 0.0
      %479 = vst.msk [vmem:[#allocation2 + $0x59] sm:$0x1] %vm469, 0.0
      %480 = vst.msk [vmem:[#allocation2 + $0x71] sm:$0x1] %vm469, 0.0
      %481 = vst.msk [vmem:[#allocation2 + $0x89] sm:$0x1] %vm469, 0.0
      %s482 = scalar_lea.vmem [#allocation2], 24
      %vm483 = vcmask 130048
      %484 = vst.msk [vmem:[%s482 + $0x1] sm:$0xff] %vm483, %v461
      %485 = vst.msk [vmem:[%s482 + $0x9] sm:$0xff] %vm483, %v462
      %486 = vst.msk [vmem:[%s482 + $0x19] sm:$0xff] %vm483, %v463
      %487 = vst.msk [vmem:[%s482 + $0x21] sm:$0xff] %vm483, %v464
      %488 = vst.msk [vmem:[%s482 + $0x31] sm:$0xff] %vm483, %v465
      %489 = vst.msk [vmem:[%s482 + $0x39] sm:$0xff] %vm483, %v466
      %490 = vst.msk [vmem:[%s482 + $0x49] sm:$0xff] %vm483, %v467
      %491 = vst.msk [vmem:[%s482 + $0x51] sm:$0xff] %vm483, %v468
      %p492 = scmp.eq.s32.totalorder %s23, 0
      // Predicated region
      $region49: #{tpu_custom_call.1} parent=47 // pred_check
        %p493 = pneg %p492
      $region50: #{tpu_custom_call.1} parent=47 // pred_check_branch
        %495 = sbr.rel (%p493) target = $region52
      $region51: #{tpu_custom_call.1} parent=47 // pred_region
        %496 = vst.msk [vmem:[#allocation2 + $0x1] sm:$0xff] %vm483, 0.0
        %497 = vst.msk [vmem:[#allocation2 + $0x9] sm:$0xff] %vm483, 0.0
      $region52: #{tpu_custom_call.1} parent=47 // pred_fallthru
        _
      %p498 = scmp.gt.s32.totalorder %s23, 0
      // Predicated region
      $region53: #{tpu_custom_call.1} parent=47 // pred_check
        %p499 = pneg %p498
      $region54: #{tpu_custom_call.1} parent=47 // pred_check_branch
        %501 = sbr.rel (%p499) target = $region56
      $region55: #{tpu_custom_call.1} parent=47 // pred_region
        %s502 = ssub.s32 %s304, 1
        %s503 = smul.u32 %s502, 16
        %s504 = scalar_lea.vmem %s292, %s503
        %v505 = vld [vmem:[%s504] sm:$0xff]
        %v506 = vld [vmem:[%s504 + $0x8] sm:$0xff]
        %v507 = vld [vmem:[%s1] sm:$0xff]
        %v508 = vld [vmem:[%s2] sm:$0x1]
        %v510 = vlaneseq
        %v511 = vshrl.u32 %v510, 7
        %v512 = vsub.s32 0, %v511
        %v513 = vrot.slane %v508, %v512
        %v516 = vsel %vm323, %v505, 0
        %v519 = vsel %vm323, %v506, 0
        %521 = vmatprep.subr.mxu0 0.0
        %522 = vmatpush1.msra.mxu0 %v507
        %523 = vmatprep.subr.mxu0 0.0
        %524 = vmatpush1.msra.mxu0 0.0
        %525 = vmatprep.subr.mxu0 0.0
        %526 = vmatpush1.msra.mxu0 0.0
        %527 = vmatprep.subr.mxu0 0.0
        %528 = vmatpush1.msra.mxu0 0.0
        %529 = vmatprep.subr.mxu0 0.0
        %530 = vmatpush1.msra.mxu0 0.0
        %531 = vmatprep.subr.mxu0 0.0
        %532 = vmatpush1.msra.mxu0 0.0
        %533 = vmatprep.subr.mxu0 0.0
        %534 = vmatpush1.msra.mxu0 0.0
        %535 = vmatprep.subr.mxu0 0.0
        %536 = vmatpush1.msra.mxu0 0.0
        %537 = vmatprep.subr.mxu0 0.0
        %538 = vmatpush1.msra.mxu0 0.0
        %539 = vmatprep.subr.mxu0 0.0
        %540 = vmatpush1.msra.mxu0 0.0
        %541 = vmatprep.subr.mxu0 0.0
        %542 = vmatpush1.msra.mxu0 0.0
        %543 = vmatprep.subr.mxu0 0.0
        %544 = vmatpush1.msra.mxu0 0.0
        %545 = vmatprep.subr.mxu0 0.0
        %546 = vmatpush1.msra.mxu0 0.0
        %547 = vmatprep.subr.mxu0 0.0
        %548 = vmatpush1.msra.mxu0 0.0
        %549 = vmatprep.subr.mxu0 0.0
        %550 = vmatpush1.msra.mxu0 0.0
        %551 = vmatprep.subr.mxu0 0.0
        %552 = vmatpush1.msra.mxu0 0.0
        %553 = vmatprep.subr.mxu0 0.0
        %554 = vmatpush1.msra.mxu0 0.0
        %555 = vmatprep.subr.mxu0 0.0
        %556 = vmatpush1.msra.mxu0 0.0
        %557 = vmatprep.subr.mxu0 0.0
        %558 = vmatpush1.msra.mxu0 0.0
        %559 = vmatprep.subr.mxu0 0.0
        %560 = vmatpush1.msra.mxu0 0.0
        %561 = vmatprep.subr.mxu0 0.0
        %562 = vmatpush1.msra.mxu0 0.0
        %563 = vmatprep.subr.mxu0 0.0
        %564 = vmatpush1.msra.mxu0 0.0
        %565 = vmatprep.subr.mxu0 0.0
        %566 = vmatpush1.msra.mxu0 0.0
        %567 = vmatprep.subr.mxu0 0.0
        %568 = vmatpush1.msra.mxu0 0.0
        %569 = vmatprep.subr.mxu0 0.0
        %570 = vmatpush1.msra.mxu0 0.0
        %571 = vmatprep.subr.mxu0 0.0
        %572 = vmatpush1.msra.mxu0 0.0
        %573 = vmatprep.subr.mxu0 0.0
        %574 = vmatpush1.msra.mxu0 0.0
        %575 = vmatprep.subr.mxu0 0.0
        %576 = vmatpush1.msra.mxu0 0.0
        %577 = vmatprep.subr.mxu0 0.0
        %578 = vmatpush1.msra.mxu0 0.0
        %579 = vmatprep.subr.mxu0 0.0
        %580 = vmatpush1.msra.mxu0 0.0
        %581 = vmatprep.subr.mxu0 0.0
        %582 = vmatpush1.msra.mxu0 0.0
        %583 = vmatprep.subr.mxu0 0.0
        %584 = vmatpush1.msra.mxu0 0.0
        %585 = vmatprep.mubr.f32.mxu0 0.0
        %586 = vmatmul.mubr.f32.gmra.mrb[0].mxu0 %v516
        %v587 = vpop.f32.mrb[0].mxu0
        %v588 = vadd.f32 %v513, %v587
        %v589 = vpop.f32.mrb[0].mxu0
        %590 = vmatprep.mubr.f32.mxu0 0.0
        %591 = vmatmul.mubr.f32.gmra.mrb[0].mxu0 %v519
        %v592 = vpop.f32.mrb[0].mxu0
        %v593 = vadd.f32 %v513, %v592
        %v594 = vpop.f32.mrb[0].mxu0
        %595 = vdwg.mxu0
        %v596 = vmax.f32 %v588, 0.0
        %v597 = vmax.f32 %v593, 0.0
        %v598 = vmin.f32 %v596, 6.0
        %v599 = vmin.f32 %v597, 6.0
        %600 = vst.msk [vmem:[#allocation2 + $0x1] sm:$0xff] %vm483, %v598
        %601 = vst.msk [vmem:[#allocation2 + $0x9] sm:$0xff] %vm483, %v599
      $region56: #{tpu_custom_call.1} parent=47 // pred_fallthru
        _
      %p602 = scmp.eq.s32.totalorder %s23, 3
      // Predicated region
      $region57: #{tpu_custom_call.1} parent=47 // pred_check
        %p603 = pneg %p602
      $region58: #{tpu_custom_call.1} parent=47 // pred_check_branch
        %605 = sbr.rel (%p603) target = $region60
      $region59: #{tpu_custom_call.1} parent=47 // pred_region
        %s606 = scalar_lea.vmem [#allocation2], 120
        %607 = vst.msk [vmem:[%s606 + $0x1] sm:$0xff] %vm483, 0.0
        %608 = vst.msk [vmem:[%s606 + $0x9] sm:$0xff] %vm483, 0.0
      $region60: #{tpu_custom_call.1} parent=47 // pred_fallthru
        _
      %p609 = scmp.lt.s32.totalorder %s23, 3
      // Predicated region
      $region61: #{tpu_custom_call.1} parent=47 // pred_check
        %p610 = pneg %p609
      $region62: #{tpu_custom_call.1} parent=47 // pred_check_branch
        %612 = sbr.rel (%p610) target = $region64
      $region63: #{tpu_custom_call.1} parent=47 // pred_region
        %s613 = sadd.s32 %s304, 4
        %s614 = smul.u32 %s613, 16
        %s615 = scalar_lea.vmem %s292, %s614
        %v616 = vld [vmem:[%s615] sm:$0xff]
        %v617 = vld [vmem:[%s615 + $0x8] sm:$0xff]
        %v618 = vld [vmem:[%s1] sm:$0xff]
        %v619 = vld [vmem:[%s2] sm:$0x1]
        %v621 = vlaneseq
        %v622 = vshrl.u32 %v621, 7
        %v623 = vsub.s32 0, %v622
        %v624 = vrot.slane %v619, %v623
        %v627 = vsel %vm323, %v616, 0
        %v630 = vsel %vm323, %v617, 0
        %632 = vmatprep.subr.mxu0 0.0
        %633 = vmatpush1.msra.mxu0 %v618
        %634 = vmatprep.subr.mxu0 0.0
        %635 = vmatpush1.msra.mxu0 0.0
        %636 = vmatprep.subr.mxu0 0.0
        %637 = vmatpush1.msra.mxu0 0.0
        %638 = vmatprep.subr.mxu0 0.0
        %639 = vmatpush1.msra.mxu0 0.0
        %640 = vmatprep.subr.mxu0 0.0
        %641 = vmatpush1.msra.mxu0 0.0
        %642 = vmatprep.subr.mxu0 0.0
        %643 = vmatpush1.msra.mxu0 0.0
        %644 = vmatprep.subr.mxu0 0.0
        %645 = vmatpush1.msra.mxu0 0.0
        %646 = vmatprep.subr.mxu0 0.0
        %647 = vmatpush1.msra.mxu0 0.0
        %648 = vmatprep.subr.mxu0 0.0
        %649 = vmatpush1.msra.mxu0 0.0
        %650 = vmatprep.subr.mxu0 0.0
        %651 = vmatpush1.msra.mxu0 0.0
        %652 = vmatprep.subr.mxu0 0.0
        %653 = vmatpush1.msra.mxu0 0.0
        %654 = vmatprep.subr.mxu0 0.0
        %655 = vmatpush1.msra.mxu0 0.0
        %656 = vmatprep.subr.mxu0 0.0
        %657 = vmatpush1.msra.mxu0 0.0
        %658 = vmatprep.subr.mxu0 0.0
        %659 = vmatpush1.msra.mxu0 0.0
        %660 = vmatprep.subr.mxu0 0.0
        %661 = vmatpush1.msra.mxu0 0.0
        %662 = vmatprep.subr.mxu0 0.0
        %663 = vmatpush1.msra.mxu0 0.0
        %664 = vmatprep.subr.mxu0 0.0
        %665 = vmatpush1.msra.mxu0 0.0
        %666 = vmatprep.subr.mxu0 0.0
        %667 = vmatpush1.msra.mxu0 0.0
        %668 = vmatprep.subr.mxu0 0.0
        %669 = vmatpush1.msra.mxu0 0.0
        %670 = vmatprep.subr.mxu0 0.0
        %671 = vmatpush1.msra.mxu0 0.0
        %672 = vmatprep.subr.mxu0 0.0
        %673 = vmatpush1.msra.mxu0 0.0
        %674 = vmatprep.subr.mxu0 0.0
        %675 = vmatpush1.msra.mxu0 0.0
        %676 = vmatprep.subr.mxu0 0.0
        %677 = vmatpush1.msra.mxu0 0.0
        %678 = vmatprep.subr.mxu0 0.0
        %679 = vmatpush1.msra.mxu0 0.0
        %680 = vmatprep.subr.mxu0 0.0
        %681 = vmatpush1.msra.mxu0 0.0
        %682 = vmatprep.subr.mxu0 0.0
        %683 = vmatpush1.msra.mxu0 0.0
        %684 = vmatprep.subr.mxu0 0.0
        %685 = vmatpush1.msra.mxu0 0.0
        %686 = vmatprep.subr.mxu0 0.0
        %687 = vmatpush1.msra.mxu0 0.0
        %688 = vmatprep.subr.mxu0 0.0
        %689 = vmatpush1.msra.mxu0 0.0
        %690 = vmatprep.subr.mxu0 0.0
        %691 = vmatpush1.msra.mxu0 0.0
        %692 = vmatprep.subr.mxu0 0.0
        %693 = vmatpush1.msra.mxu0 0.0
        %694 = vmatprep.subr.mxu0 0.0
        %695 = vmatpush1.msra.mxu0 0.0
        %696 = vmatprep.mubr.f32.mxu0 0.0
        %697 = vmatmul.mubr.f32.gmra.mrb[0].mxu0 %v627
        %v698 = vpop.f32.mrb[0].mxu0
        %v699 = vadd.f32 %v624, %v698
        %v700 = vpop.f32.mrb[0].mxu0
        %701 = vmatprep.mubr.f32.mxu0 0.0
        %702 = vmatmul.mubr.f32.gmra.mrb[0].mxu0 %v630
        %v703 = vpop.f32.mrb[0].mxu0
        %v704 = vadd.f32 %v624, %v703
        %v705 = vpop.f32.mrb[0].mxu0
        %706 = vdwg.mxu0
        %v707 = vmax.f32 %v699, 0.0
        %v708 = vmax.f32 %v704, 0.0
        %v709 = vmin.f32 %v707, 6.0
        %v710 = vmin.f32 %v708, 6.0
        %s711 = scalar_lea.vmem [#allocation2], 120
        %712 = vst.msk [vmem:[%s711 + $0x1] sm:$0xff] %vm483, %v709
        %713 = vst.msk [vmem:[%s711 + $0x9] sm:$0xff] %vm483, %v710
      $region64: #{tpu_custom_call.1} parent=47 // pred_fallthru
        _
      %v714 = vld [vmem:[#allocation2] sm:$0xff]
      %v715 = vld [vmem:[#allocation2 + $0x8] sm:$0xff]
      %v716 = vld [vmem:[#allocation2 + $0x18] sm:$0xff]
      %v717 = vld [vmem:[#allocation2 + $0x20] sm:$0xff]
      %v718 = vld [vmem:[#allocation2 + $0x30] sm:$0xff]
      %v719 = vld [vmem:[#allocation2 + $0x38] sm:$0xff]
      %v720 = vld [vmem:[#allocation2 + $0x48] sm:$0xff]
      %v721 = vld [vmem:[#allocation2 + $0x50] sm:$0xff]
      %v722 = vld [vmem:[%s3] sm:$0x1]
      %v723 = vlaneseq
      %v724 = vshrl.u32 %v723, 7
      %v725 = vsub.s32 0, %v724
      %v726 = vrot.slane %v722, %v725
      %v727 = vmul.f32 %v714, %v726
      %v728 = vmul.f32 %v715, %v726
      %v729 = vmul.f32 %v716, %v726
      %v730 = vmul.f32 %v717, %v726
      %v731 = vmul.f32 %v718, %v726
      %v732 = vmul.f32 %v719, %v726
      %v733 = vmul.f32 %v720, %v726
      %v734 = vmul.f32 %v721, %v726
      %v735 = vld [vmem:[#allocation2 + $0x1] sm:$0xff]
      %v736 = vld [vmem:[#allocation2 + $0x9] sm:$0xff]
      %v737 = vld [vmem:[#allocation2 + $0x19] sm:$0xff]
      %v738 = vld [vmem:[#allocation2 + $0x21] sm:$0xff]
      %v739 = vld [vmem:[#allocation2 + $0x31] sm:$0xff]
      %v740 = vld [vmem:[#allocation2 + $0x39] sm:$0xff]
      %v741 = vld [vmem:[#allocation2 + $0x49] sm:$0xff]
      %v742 = vld [vmem:[#allocation2 + $0x51] sm:$0xff]
      %v743 = vld [vmem:[%s3 + $0x1] sm:$0x1]
      %v744 = vlaneseq
      %v745 = vshrl.u32 %v744, 7
      %v746 = vsub.s32 0, %v745
      %v747 = vrot.slane %v743, %v746
      %v748 = vmul.f32 %v735, %v747
      %v749 = vmul.f32 %v736, %v747
      %v750 = vmul.f32 %v737, %v747
      %v751 = vmul.f32 %v738, %v747
      %v752 = vmul.f32 %v739, %v747
      %v753 = vmul.f32 %v740, %v747
      %v754 = vmul.f32 %v741, %v747
      %v755 = vmul.f32 %v742, %v747
      %v756 = vadd.f32 %v727, %v748
      %v757 = vadd.f32 %v728, %v749
      %v758 = vadd.f32 %v729, %v750
      %v759 = vadd.f32 %v730, %v751
      %v760 = vadd.f32 %v731, %v752
      %v761 = vadd.f32 %v732, %v753
      %v762 = vadd.f32 %v733, %v754
      %v763 = vadd.f32 %v734, %v755
      %v764 = vld [vmem:[#allocation2 + $0x2] sm:$0xff]
      %v765 = vld [vmem:[#allocation2 + $0xa] sm:$0xff]
      %v766 = vld [vmem:[#allocation2 + $0x1a] sm:$0xff]
      %v767 = vld [vmem:[#allocation2 + $0x22] sm:$0xff]
      %v768 = vld [vmem:[#allocation2 + $0x32] sm:$0xff]
      %v769 = vld [vmem:[#allocation2 + $0x3a] sm:$0xff]
      %v770 = vld [vmem:[#allocation2 + $0x4a] sm:$0xff]
      %v771 = vld [vmem:[#allocation2 + $0x52] sm:$0xff]
      %v772 = vld [vmem:[%s3 + $0x2] sm:$0x1]
      %v773 = vlaneseq
      %v774 = vshrl.u32 %v773, 7
      %v775 = vsub.s32 0, %v774
      %v776 = vrot.slane %v772, %v775
      %v777 = vmul.f32 %v764, %v776
      %v778 = vmul.f32 %v765, %v776
      %v779 = vmul.f32 %v766, %v776
      %v780 = vmul.f32 %v767, %v776
      %v781 = vmul.f32 %v768, %v776
      %v782 = vmul.f32 %v769, %v776
      %v783 = vmul.f32 %v770, %v776
      %v784 = vmul.f32 %v771, %v776
      %v785 = vadd.f32 %v756, %v777
      %v786 = vadd.f32 %v757, %v778
      %v787 = vadd.f32 %v758, %v779
      %v788 = vadd.f32 %v759, %v780
      %v789 = vadd.f32 %v760, %v781
      %v790 = vadd.f32 %v761, %v782
      %v791 = vadd.f32 %v762, %v783
      %v792 = vadd.f32 %v763, %v784
      %v793 = vld [vmem:[%s482] sm:$0xff]
      %v794 = vld [vmem:[%s482 + $0x8] sm:$0xff]
      %v795 = vld [vmem:[%s482 + $0x18] sm:$0xff]
      %v796 = vld [vmem:[%s482 + $0x20] sm:$0xff]
      %v797 = vld [vmem:[%s482 + $0x30] sm:$0xff]
      %v798 = vld [vmem:[%s482 + $0x38] sm:$0xff]
      %v799 = vld [vmem:[%s482 + $0x48] sm:$0xff]
      %v800 = vld [vmem:[%s482 + $0x50] sm:$0xff]
      %s801 = scalar_lea.vmem %s3, 4
      %v802 = vld [vmem:[%s801] sm:$0x1]
      %v803 = vlaneseq
      %v804 = vshrl.u32 %v803, 7
      %v805 = vsub.s32 0, %v804
      %v806 = vrot.slane %v802, %v805
      %v807 = vmul.f32 %v793, %v806
      %v808 = vmul.f32 %v794, %v806
      %v809 = vmul.f32 %v795, %v806
      %v810 = vmul.f32 %v796, %v806
      %v811 = vmul.f32 %v797, %v806
      %v812 = vmul.f32 %v798, %v806
      %v813 = vmul.f32 %v799, %v806
      %v814 = vmul.f32 %v800, %v806
      %v815 = vadd.f32 %v785, %v807
      %v816 = vadd.f32 %v786, %v808
      %v817 = vadd.f32 %v787, %v809
      %v818 = vadd.f32 %v788, %v810
      %v819 = vadd.f32 %v789, %v811
      %v820 = vadd.f32 %v790, %v812
      %v821 = vadd.f32 %v791, %v813
      %v822 = vadd.f32 %v792, %v814
      %v823 = vld [vmem:[%s482 + $0x1] sm:$0xff]
      %v824 = vld [vmem:[%s482 + $0x9] sm:$0xff]
      %v825 = vld [vmem:[%s482 + $0x19] sm:$0xff]
      %v826 = vld [vmem:[%s482 + $0x21] sm:$0xff]
      %v827 = vld [vmem:[%s482 + $0x31] sm:$0xff]
      %v828 = vld [vmem:[%s482 + $0x39] sm:$0xff]
      %v829 = vld [vmem:[%s482 + $0x49] sm:$0xff]
      %v830 = vld [vmem:[%s482 + $0x51] sm:$0xff]
      %v831 = vld [vmem:[%s801 + $0x1] sm:$0x1]
      %v832 = vlaneseq
      %v833 = vshrl.u32 %v832, 7
      %v834 = vsub.s32 0, %v833
      %v835 = vrot.slane %v831, %v834
      %v836 = vmul.f32 %v823, %v835
      %v837 = vmul.f32 %v824, %v835
      %v838 = vmul.f32 %v825, %v835
      %v839 = vmul.f32 %v826, %v835
      %v840 = vmul.f32 %v827, %v835
      %v841 = vmul.f32 %v828, %v835
      %v842 = vmul.f32 %v829, %v835
      %v843 = vmul.f32 %v830, %v835
      %v844 = vadd.f32 %v815, %v836
      %v845 = vadd.f32 %v816, %v837
      %v846 = vadd.f32 %v817, %v838
      %v847 = vadd.f32 %v818, %v839
      %v848 = vadd.f32 %v819, %v840
      %v849 = vadd.f32 %v820, %v841
      %v850 = vadd.f32 %v821, %v842
      %v851 = vadd.f32 %v822, %v843
      %v852 = vld [vmem:[%s482 + $0x2] sm:$0xff]
      %v853 = vld [vmem:[%s482 + $0xa] sm:$0xff]
      %v854 = vld [vmem:[%s482 + $0x1a] sm:$0xff]
      %v855 = vld [vmem:[%s482 + $0x22] sm:$0xff]
      %v856 = vld [vmem:[%s482 + $0x32] sm:$0xff]
      %v857 = vld [vmem:[%s482 + $0x3a] sm:$0xff]
      %v858 = vld [vmem:[%s482 + $0x4a] sm:$0xff]
      %v859 = vld [vmem:[%s482 + $0x52] sm:$0xff]
      %v860 = vld [vmem:[%s801 + $0x2] sm:$0x1]
      %v861 = vlaneseq
      %v862 = vshrl.u32 %v861, 7
      %v863 = vsub.s32 0, %v862
      %v864 = vrot.slane %v860, %v863
      %v865 = vmul.f32 %v852, %v864
      %v866 = vmul.f32 %v853, %v864
      %v867 = vmul.f32 %v854, %v864
      %v868 = vmul.f32 %v855, %v864
      %v869 = vmul.f32 %v856, %v864
      %v870 = vmul.f32 %v857, %v864
      %v871 = vmul.f32 %v858, %v864
      %v872 = vmul.f32 %v859, %v864
      %v873 = vadd.f32 %v844, %v865
      %v874 = vadd.f32 %v845, %v866
      %v875 = vadd.f32 %v846, %v867
      %v876 = vadd.f32 %v847, %v868
      %v877 = vadd.f32 %v848, %v869
      %v878 = vadd.f32 %v849, %v870
      %v879 = vadd.f32 %v850, %v871
      %v880 = vadd.f32 %v851, %v872
      %s881 = scalar_lea.vmem [#allocation2], 48
      %v882 = vld [vmem:[%s881] sm:$0xff]
      %v883 = vld [vmem:[%s881 + $0x8] sm:$0xff]
      %v884 = vld [vmem:[%s881 + $0x18] sm:$0xff]
      %v885 = vld [vmem:[%s881 + $0x20] sm:$0xff]
      %v886 = vld [vmem:[%s881 + $0x30] sm:$0xff]
      %v887 = vld [vmem:[%s881 + $0x38] sm:$0xff]
      %v888 = vld [vmem:[%s881 + $0x48] sm:$0xff]
      %v889 = vld [vmem:[%s881 + $0x50] sm:$0xff]
      %s890 = scalar_lea.vmem %s3, 8
      %v891 = vld [vmem:[%s890] sm:$0x1]
      %v892 = vlaneseq
      %v893 = vshrl.u32 %v892, 7
      %v894 = vsub.s32 0, %v893
      %v895 = vrot.slane %v891, %v894
      %v896 = vmul.f32 %v882, %v895
      %v897 = vmul.f32 %v883, %v895
      %v898 = vmul.f32 %v884, %v895
      %v899 = vmul.f32 %v885, %v895
      %v900 = vmul.f32 %v886, %v895
      %v901 = vmul.f32 %v887, %v895
      %v902 = vmul.f32 %v888, %v895
      %v903 = vmul.f32 %v889, %v895
      %v904 = vadd.f32 %v873, %v896
      %v905 = vadd.f32 %v874, %v897
      %v906 = vadd.f32 %v875, %v898
      %v907 = vadd.f32 %v876, %v899
      %v908 = vadd.f32 %v877, %v900
      %v909 = vadd.f32 %v878, %v901
      %v910 = vadd.f32 %v879, %v902
      %v911 = vadd.f32 %v880, %v903
      %v912 = vld [vmem:[%s881 + $0x1] sm:$0xff]
      %v913 = vld [vmem:[%s881 + $0x9] sm:$0xff]
      %v914 = vld [vmem:[%s881 + $0x19] sm:$0xff]
      %v915 = vld [vmem:[%s881 + $0x21] sm:$0xff]
      %v916 = vld [vmem:[%s881 + $0x31] sm:$0xff]
      %v917 = vld [vmem:[%s881 + $0x39] sm:$0xff]
      %v918 = vld [vmem:[%s881 + $0x49] sm:$0xff]
      %v919 = vld [vmem:[%s881 + $0x51] sm:$0xff]
      %v920 = vld [vmem:[%s890 + $0x1] sm:$0x1]
      %v921 = vlaneseq
      %v922 = vshrl.u32 %v921, 7
      %v923 = vsub.s32 0, %v922
      %v924 = vrot.slane %v920, %v923
      %v925 = vmul.f32 %v912, %v924
      %v926 = vmul.f32 %v913, %v924
      %v927 = vmul.f32 %v914, %v924
      %v928 = vmul.f32 %v915, %v924
      %v929 = vmul.f32 %v916, %v924
      %v930 = vmul.f32 %v917, %v924
      %v931 = vmul.f32 %v918, %v924
      %v932 = vmul.f32 %v919, %v924
      %v933 = vadd.f32 %v904, %v925
      %v934 = vadd.f32 %v905, %v926
      %v935 = vadd.f32 %v906, %v927
      %v936 = vadd.f32 %v907, %v928
      %v937 = vadd.f32 %v908, %v929
      %v938 = vadd.f32 %v909, %v930
      %v939 = vadd.f32 %v910, %v931
      %v940 = vadd.f32 %v911, %v932
      %v941 = vld [vmem:[%s881 + $0x2] sm:$0xff]
      %v942 = vld [vmem:[%s881 + $0xa] sm:$0xff]
      %v943 = vld [vmem:[%s881 + $0x1a] sm:$0xff]
      %v944 = vld [vmem:[%s881 + $0x22] sm:$0xff]
      %v945 = vld [vmem:[%s881 + $0x32] sm:$0xff]
      %v946 = vld [vmem:[%s881 + $0x3a] sm:$0xff]
      %v947 = vld [vmem:[%s881 + $0x4a] sm:$0xff]
      %v948 = vld [vmem:[%s881 + $0x52] sm:$0xff]
      %v949 = vld [vmem:[%s890 + $0x2] sm:$0x1]
      %v950 = vlaneseq
      %v951 = vshrl.u32 %v950, 7
      %v952 = vsub.s32 0, %v951
      %v953 = vrot.slane %v949, %v952
      %v954 = vmul.f32 %v941, %v953
      %v955 = vmul.f32 %v942, %v953
      %v956 = vmul.f32 %v943, %v953
      %v957 = vmul.f32 %v944, %v953
      %v958 = vmul.f32 %v945, %v953
      %v959 = vmul.f32 %v946, %v953
      %v960 = vmul.f32 %v947, %v953
      %v961 = vmul.f32 %v948, %v953
      %v962 = vadd.f32 %v933, %v954
      %v963 = vadd.f32 %v934, %v955
      %v964 = vadd.f32 %v935, %v956
      %v965 = vadd.f32 %v936, %v957
      %v966 = vadd.f32 %v937, %v958
      %v967 = vadd.f32 %v938, %v959
      %v968 = vadd.f32 %v939, %v960
      %v969 = vadd.f32 %v940, %v961
      %v970 = vld [vmem:[%s4] sm:$0x1]
      %v972 = vlaneseq
      %v973 = vshrl.u32 %v972, 7
      %v974 = vsub.s32 0, %v973
      %v975 = vrot.slane %v970, %v974
      %v977 = vadd.f32 %v962, %v975
      %v978 = vadd.f32 %v963, %v975
      %v979 = vadd.f32 %v964, %v975
      %v980 = vadd.f32 %v965, %v975
      %v981 = vadd.f32 %v966, %v975
      %v982 = vadd.f32 %v967, %v975
      %v983 = vadd.f32 %v968, %v975
      %v984 = vadd.f32 %v969, %v975
      %v985 = vmax.f32 %v977, 0.0
      %v986 = vmax.f32 %v978, 0.0
      %v987 = vmax.f32 %v979, 0.0
      %v988 = vmax.f32 %v980, 0.0
      %v989 = vmax.f32 %v981, 0.0
      %v990 = vmax.f32 %v982, 0.0
      %v991 = vmax.f32 %v983, 0.0
      %v992 = vmax.f32 %v984, 0.0
      %v993 = vmin.f32 %v985, 6.0
      %v994 = vmin.f32 %v986, 6.0
      %v995 = vmin.f32 %v987, 6.0
      %v996 = vmin.f32 %v988, 6.0
      %v997 = vmin.f32 %v989, 6.0
      %v998 = vmin.f32 %v990, 6.0
      %v999 = vmin.f32 %v991, 6.0
      %v1000 = vmin.f32 %v992, 6.0
      %v1001 = vld [vmem:[%s5] sm:$0xff]
      %v1002 = vld [vmem:[%s5 + $0x8] sm:$0xff]
      %v1003 = vld [vmem:[%s6] sm:$0x1]
      %v1005 = vlaneseq
      %v1006 = vshrl.u32 %v1005, 7
      %v1007 = vsub.s32 0, %v1006
      %v1008 = vrot.slane %v1003, %v1007
      %v1011 = vsel %vm483, %v993, 0
      %v1014 = vsel %vm483, %v994, 0
      %v1017 = vsel %vm483, %v995, 0
      %v1020 = vsel %vm483, %v996, 0
      %v1023 = vsel %vm483, %v997, 0
      %v1026 = vsel %vm483, %v998, 0
      %v1029 = vsel %vm483, %v999, 0
      %v1032 = vsel %vm483, %v1000, 0
      %1034 = vmatprep.subr.mxu0 0.0
      %1035 = vmatpush1.msra.mxu0 %v1001
      %1036 = vmatprep.subr.mxu0 0.0
      %1037 = vmatpush1.msra.mxu0 %v1002
      %1038 = vmatprep.subr.mxu0 0.0
      %1039 = vmatpush1.msra.mxu0 0.0
      %1040 = vmatprep.subr.mxu0 0.0
      %1041 = vmatpush1.msra.mxu0 0.0
      %1042 = vmatprep.subr.mxu0 0.0
      %1043 = vmatpush1.msra.mxu0 0.0
      %1044 = vmatprep.subr.mxu0 0.0
      %1045 = vmatpush1.msra.mxu0 0.0
      %1046 = vmatprep.subr.mxu0 0.0
      %1047 = vmatpush1.msra.mxu0 0.0
      %1048 = vmatprep.subr.mxu0 0.0
      %1049 = vmatpush1.msra.mxu0 0.0
      %1050 = vmatprep.subr.mxu0 0.0
      %1051 = vmatpush1.msra.mxu0 0.0
      %1052 = vmatprep.subr.mxu0 0.0
      %1053 = vmatpush1.msra.mxu0 0.0
      %1054 = vmatprep.subr.mxu0 0.0
      %1055 = vmatpush1.msra.mxu0 0.0
      %1056 = vmatprep.subr.mxu0 0.0
      %1057 = vmatpush1.msra.mxu0 0.0
      %1058 = vmatprep.subr.mxu0 0.0
      %1059 = vmatpush1.msra.mxu0 0.0
      %1060 = vmatprep.subr.mxu0 0.0
      %1061 = vmatpush1.msra.mxu0 0.0
      %1062 = vmatprep.subr.mxu0 0.0
      %1063 = vmatpush1.msra.mxu0 0.0
      %1064 = vmatprep.subr.mxu0 0.0
      %1065 = vmatpush1.msra.mxu0 0.0
      %1066 = vmatprep.subr.mxu0 0.0
      %1067 = vmatpush1.msra.mxu0 0.0
      %1068 = vmatprep.subr.mxu0 0.0
      %1069 = vmatpush1.msra.mxu0 0.0
      %1070 = vmatprep.subr.mxu0 0.0
      %1071 = vmatpush1.msra.mxu0 0.0
      %1072 = vmatprep.subr.mxu0 0.0
      %1073 = vmatpush1.msra.mxu0 0.0
      %1074 = vmatprep.subr.mxu0 0.0
      %1075 = vmatpush1.msra.mxu0 0.0
      %1076 = vmatprep.subr.mxu0 0.0
      %1077 = vmatpush1.msra.mxu0 0.0
      %1078 = vmatprep.subr.mxu0 0.0
      %1079 = vmatpush1.msra.mxu0 0.0
      %1080 = vmatprep.subr.mxu0 0.0
      %1081 = vmatpush1.msra.mxu0 0.0
      %1082 = vmatprep.subr.mxu0 0.0
      %1083 = vmatpush1.msra.mxu0 0.0
      %1084 = vmatprep.subr.mxu0 0.0
      %1085 = vmatpush1.msra.mxu0 0.0
      %1086 = vmatprep.subr.mxu0 0.0
      %1087 = vmatpush1.msra.mxu0 0.0
      %1088 = vmatprep.subr.mxu0 0.0
      %1089 = vmatpush1.msra.mxu0 0.0
      %1090 = vmatprep.subr.mxu0 0.0
      %1091 = vmatpush1.msra.mxu0 0.0
      %1092 = vmatprep.subr.mxu0 0.0
      %1093 = vmatpush1.msra.mxu0 0.0
      %1094 = vmatprep.subr.mxu0 0.0
      %1095 = vmatpush1.msra.mxu0 0.0
      %1096 = vmatprep.subr.mxu0 0.0
      %1097 = vmatpush1.msra.mxu0 0.0
      %1098 = vmatprep.mubr.f32.mxu0 0.0
      %1099 = vmatmul.mubr.f32.gmra.mrb[0].mxu0 %v1011
      %v1100 = vpop.f32.mrb[0].mxu0
      %v1101 = vadd.f32 %v1008, %v1100
      %v1102 = vpop.f32.mrb[0].mxu0
      %1103 = vmatprep.mubr.f32.mxu0 0.0
      %1104 = vmatmul.mubr.f32.gmra.mrb[0].mxu0 %v1014
      %v1105 = vpop.f32.mrb[0].mxu0
      %v1106 = vadd.f32 %v1008, %v1105
      %v1107 = vpop.f32.mrb[0].mxu0
      %1108 = vmatprep.mubr.f32.mxu0 0.0
      %1109 = vmatmul.mubr.f32.gmra.mrb[0].mxu0 %v1017
      %v1110 = vpop.f32.mrb[0].mxu0
      %v1111 = vadd.f32 %v1008, %v1110
      %v1112 = vpop.f32.mrb[0].mxu0
      %1113 = vmatprep.mubr.f32.mxu0 0.0
      %1114 = vmatmul.mubr.f32.gmra.mrb[0].mxu0 %v1020
      %v1115 = vpop.f32.mrb[0].mxu0
      %v1116 = vadd.f32 %v1008, %v1115
      %v1117 = vpop.f32.mrb[0].mxu0
      %1118 = vmatprep.mubr.f32.mxu0 0.0
      %1119 = vmatmul.mubr.f32.gmra.mrb[0].mxu0 %v1023
      %v1120 = vpop.f32.mrb[0].mxu0
      %v1121 = vadd.f32 %v1008, %v1120
      %v1122 = vpop.f32.mrb[0].mxu0
      %1123 = vmatprep.mubr.f32.mxu0 0.0
      %1124 = vmatmul.mubr.f32.gmra.mrb[0].mxu0 %v1026
      %v1125 = vpop.f32.mrb[0].mxu0
      %v1126 = vadd.f32 %v1008, %v1125
      %v1127 = vpop.f32.mrb[0].mxu0
      %1128 = vmatprep.mubr.f32.mxu0 0.0
      %1129 = vmatmul.mubr.f32.gmra.mrb[0].mxu0 %v1029
      %v1130 = vpop.f32.mrb[0].mxu0
      %v1131 = vadd.f32 %v1008, %v1130
      %v1132 = vpop.f32.mrb[0].mxu0
      %1133 = vmatprep.mubr.f32.mxu0 0.0
      %1134 = vmatmul.mubr.f32.gmra.mrb[0].mxu0 %v1032
      %v1135 = vpop.f32.mrb[0].mxu0
      %v1136 = vadd.f32 %v1008, %v1135
      %v1137 = vpop.f32.mrb[0].mxu0
      %1138 = vdwg.mxu0
      %v1139 = vadd.f32 %v1101, %v307
      %v1140 = vadd.f32 %v1106, %v308
      %v1141 = vadd.f32 %v1111, %v309
      %v1142 = vadd.f32 %v1116, %v310
      %v1143 = vadd.f32 %v1121, %v311
      %v1144 = vadd.f32 %v1126, %v312
      %v1145 = vadd.f32 %v1131, %v313
      %v1146 = vadd.f32 %v1136, %v314
      %1147 = vst.msk [vmem:[%s302] sm:$0xff] %vm323, %v1139
      %1148 = vst.msk [vmem:[%s302 + $0x8] sm:$0xff] %vm323, %v1140
      %1149 = vst.msk [vmem:[%s302 + $0x10] sm:$0xff] %vm323, %v1141
      %1150 = vst.msk [vmem:[%s302 + $0x18] sm:$0xff] %vm323, %v1142
      %1151 = vst.msk [vmem:[%s302 + $0x20] sm:$0xff] %vm323, %v1143
      %1152 = vst.msk [vmem:[%s302 + $0x28] sm:$0xff] %vm323, %v1144
      %1153 = vst.msk [vmem:[%s302 + $0x30] sm:$0xff] %vm323, %v1145
      %1154 = vst.msk [vmem:[%s302 + $0x38] sm:$0xff] %vm323, %v1146
      %s1155 = smul.u32 4, %s23
      %p1156 = scmp.lt.s32.totalorder %s22, 1
      %s1157 = scalar_select %p1156, %s22, 1
      %p1158 = scmp.lt.s32.totalorder %s1155, 15
      %s1159 = scalar_select %p1158, %s1155, 15
      %s1160 = smul.addr %s1159, 2
      %s1161 = smul.addr %s1157, 32
      %s1162 = sadd.s32 %s1160, %s1161
      %s1163 = smul.addr %s1162, 8
      %s1164 = scalar_lea.vmem %s7, %s1163
      // Predicated region
      $region65: #{tpu_custom_call.1} parent=47 // pred_check
        %p1165 = pneg %p202
      $region66: #{tpu_custom_call.1} parent=47 // pred_check_branch
        %1167 = sbr.rel (%p1165) target = $region68
      $region67: #{tpu_custom_call.1} parent=47 // pred_region
        %s1168 = smul.u32 4, %s23
      $region68: #{tpu_custom_call.1} parent=47 // pred_fallthru
        _
    $region48: #{tpu_custom_call.1} parent=5 // pred_fallthru
      _
    %p1169 = scmp.le.s32.totalorder 2, %s13
    // Predicated region
    $region69: #{tpu_custom_call.1} parent=5 // pred_check
      %p1170 = pneg %p1169
    $region70: #{tpu_custom_call.1} parent=5 // pred_check_branch
      %1172 = sbr.rel (%p1170) target = $region72
    $region71: #{tpu_custom_call.1} parent=5 // pred_region
      %s1173 = ssub.s32 %s13, 2
      // Predicated region
      $region73: #{tpu_custom_call.1} parent=71 // pred_check
        %p1174 = pneg %p208
      $region74: #{tpu_custom_call.1} parent=71 // pred_check_branch
        %1176 = sbr.rel (%p1174) target = $region76
      $region75: #{tpu_custom_call.1} parent=71 // pred_region
        %s1177 = smul.u32 4, %s25
        %p1178 = scmp.lt.s32.totalorder %s24, 1
        %s1179 = scalar_select %p1178, %s24, 1
        %p1180 = scmp.lt.s32.totalorder %s1177, 15
        %s1181 = scalar_select %p1180, %s1177, 15
        %s1182 = smul.addr %s1181, 2
        %s1183 = smul.addr %s1179, 32
        %s1184 = sadd.s32 %s1182, %s1183
        %s1185 = smul.addr %s1184, 8
        %s1186 = scalar_lea.vmem %s7, %s1185
      $region76: #{tpu_custom_call.1} parent=71 // pred_fallthru
        _
    $region72: #{tpu_custom_call.1} parent=5 // pred_fallthru
      _
  $region6: #{tpu_custom_call.1} parent=0 // loop_footer
    %s17 = sadd.s32 1, %s13
  $region7: #{tpu_custom_call.1} parent=0 // loop_footer_branch
    %12 = sbr.rel target = $region3
  $region8: #{tpu_custom_call.1} parent=0 // loop_exit
    _

</llo_original>
